<compile_context>
chip_gen: v6e
topology: v6e:2x2x1
jax: 0.10.0
libtpu: 0.0.40
codegen_flags: <defaults>
</compile_context>

<pallas_src>
import functools

import jax
import jax.numpy as jnp
from jax.experimental import pallas as pl
from jax.experimental.pallas import tpu as pltpu


def _round_up(x, m):
    return (x + m - 1) // m * m


def _pick_tile(dim, prefs):
    """Largest preferred tile that evenly divides `dim`."""
    for t in prefs:
        if dim % t == 0:
            return t
    return dim


def _pad_cast(x, rows_to, cols_to, dtype):
    r, c = x.shape
    return jnp.zeros((rows_to, cols_to), dtype).at[:r, :c].set(x.astype(dtype))


# --------------------------------------------------------------------------- #
# Kernel 1: x1 = relu(adj @ support + b1), fused epilogue s2 = x1_bf16 @ W2.
# --------------------------------------------------------------------------- #
def _gc1_s2_kernel(adj_ref, sup_ref, b1_ref, w2_ref, x1_ref, s2_ref, acc_ref,
                   *, tk, b_resident):
    k = pl.program_id(1)

    @pl.when(k == 0)
    def _():
        acc_ref[...] = jnp.zeros_like(acc_ref)

    if b_resident:
        # B panel is VMEM-resident (constant block index); slice the k-window.
        off = pl.multiple_of(k * tk, tk)
        b_blk = sup_ref[pl.ds(off, tk), :]
    else:
        b_blk = sup_ref[...]
    acc_ref[...] += jnp.dot(adj_ref[...], b_blk,
                            preferred_element_type=jnp.float32)

    @pl.when(k == pl.num_programs(1) - 1)
    def _():
        # gc1 epilogue (bias + relu). Padded rows only ever see relu(b1); they
        # are sliced away and adj's padded columns are zero.
        x1 = jnp.maximum(acc_ref[...] + b1_ref[...], 0.0)
        x1_ref[...] = x1.astype(x1_ref.dtype)
        # Fused s2 = x1 @ W2: one extra 128x128 MXU op per tile, free under the
        # DMA-bound adj stream; saves a whole pallas_call + x1 HBM round-trip.
        s2 = jnp.dot(x1.astype(w2_ref.dtype), w2_ref[...],
                     preferred_element_type=jnp.float32)
        s2_ref[...] = s2.astype(s2_ref.dtype)


def _call_gc1_s2(adj_p, support_p, b1_p, W2_p, *, tm, tk, b_resident,
                 vmem_limit):
    NPm, NPk = adj_p.shape
    FH = support_p.shape[1]
    F2 = W2_p.shape[1]
    grid = (NPm // tm, NPk // tk)

    if b_resident:
        sup_spec = pl.BlockSpec((NPk, FH), lambda i, k: (0, 0))
    else:
        sup_spec = pl.BlockSpec((tk, FH), lambda i, k: (k, 0))

    return pl.pallas_call(
        functools.partial(_gc1_s2_kernel, tk=tk, b_resident=b_resident),
        out_shape=(jax.ShapeDtypeStruct((NPm, FH), jnp.float32),
                   jax.ShapeDtypeStruct((NPm, F2), jnp.bfloat16)),
        grid_spec=pltpu.PrefetchScalarGridSpec(
            num_scalar_prefetch=0,
            grid=grid,
            in_specs=[
                pl.BlockSpec((tm, tk), lambda i, k: (i, k)),   # adj stream
                sup_spec,                                      # support panel
                pl.BlockSpec((1, FH), lambda i, k: (0, 0)),    # b1
                pl.BlockSpec((FH, F2), lambda i, k: (0, 0)),   # W2 (resident)
            ],
            out_specs=[
                pl.BlockSpec((tm, FH), lambda i, k: (i, 0)),   # x1 (f32)
                pl.BlockSpec((tm, F2), lambda i, k: (i, 0)),   # s2 (bf16)
            ],
            scratch_shapes=[pltpu.VMEM((tm, FH), jnp.float32)],
        ),
        compiler_params=pltpu.CompilerParams(
            dimension_semantics=("parallel", "arbitrary"),
            vmem_limit_bytes=vmem_limit,
        ),
    )(adj_p, support_p, b1_p, W2_p)


# --------------------------------------------------------------------------- #
# Kernel 2: h = relu(adj @ s2 + b2), fused epilogue
#           x2 = sigmoid(h_bf16 @ W_fc^T + b_fc).  h never hits HBM.
# --------------------------------------------------------------------------- #
def _gc2_fc_kernel(adj_ref, s2_ref, b2_ref, wfc_ref, bfc_ref, x2_ref, acc_ref,
                   *, tk, b_resident):
    k = pl.program_id(1)

    @pl.when(k == 0)
    def _():
        acc_ref[...] = jnp.zeros_like(acc_ref)

    if b_resident:
        off = pl.multiple_of(k * tk, tk)
        b_blk = s2_ref[pl.ds(off, tk), :]
    else:
        b_blk = s2_ref[...]
    acc_ref[...] += jnp.dot(adj_ref[...], b_blk,
                            preferred_element_type=jnp.float32)

    @pl.when(k == pl.num_programs(1) - 1)
    def _():
        h = jnp.maximum(acc_ref[...] + b2_ref[...], 0.0)
        logits = jnp.dot(h.astype(wfc_ref.dtype), wfc_ref[...],
                         preferred_element_type=jnp.float32) + bfc_ref[...]
        x2_ref[...] = jax.nn.sigmoid(logits).astype(x2_ref.dtype)


def _call_gc2_fc(adj_p, s2_p, b2_p, WfcT_p, bfc_p, *, tm, tk, b_resident,
                 vmem_limit):
    NPm, NPk = adj_p.shape
    F2 = s2_p.shape[1]
    FC = WfcT_p.shape[1]
    grid = (NPm // tm, NPk // tk)

    if b_resident:
        s2_spec = pl.BlockSpec((NPk, F2), lambda i, k: (0, 0))
    else:
        s2_spec = pl.BlockSpec((tk, F2), lambda i, k: (k, 0))

    return pl.pallas_call(
        functools.partial(_gc2_fc_kernel, tk=tk, b_resident=b_resident),
        out_shape=jax.ShapeDtypeStruct((NPm, FC), jnp.float32),
        grid_spec=pltpu.PrefetchScalarGridSpec(
            num_scalar_prefetch=0,
            grid=grid,
            in_specs=[
                pl.BlockSpec((tm, tk), lambda i, k: (i, k)),   # adj stream
                s2_spec,                                       # s2 panel
                pl.BlockSpec((1, F2), lambda i, k: (0, 0)),    # b2
                pl.BlockSpec((F2, FC), lambda i, k: (0, 0)),   # W_fc^T (resident)
                pl.BlockSpec((1, FC), lambda i, k: (0, 0)),    # b_fc
            ],
            out_specs=pl.BlockSpec((tm, FC), lambda i, k: (i, 0)),
            scratch_shapes=[pltpu.VMEM((tm, F2), jnp.float32)],
        ),
        compiler_params=pltpu.CompilerParams(
            dimension_semantics=("parallel", "arbitrary"),
            vmem_limit_bytes=vmem_limit,
        ),
    )(adj_p, s2_p, b2_p, WfcT_p, bfc_p)


# --------------------------------------------------------------------------- #
# Parameters & forward factory
# --------------------------------------------------------------------------- #
def init_gcn_params(key, nfeat, nhid, nclass):
    k1, k2, k3, k4 = jax.random.split(key, 4)
    stdv1 = (6.0 / (nfeat + nhid)) ** 0.5
    W1 = jax.random.uniform(k1, (nfeat, nhid), jnp.float32, -stdv1, stdv1)
    b1 = jnp.zeros((1, nhid), jnp.float32)
    stdv2 = (6.0 / (nhid + nclass * 3)) ** 0.5
    W2 = jax.random.uniform(k2, (nhid, nclass * 3), jnp.float32, -stdv2, stdv2)
    b2 = jnp.zeros((1, nclass * 3), jnp.float32)
    # nn.Linear(nclass*3, nclass)-style init; weight stored PRE-TRANSPOSED
    # (kernel-ready (3*nclass, nclass)) so forward never pays a transpose.
    bound = 1.0 / (nclass * 3) ** 0.5
    W_fcT = jax.random.uniform(k3, (nclass, nclass * 3), jnp.float32,
                               -bound, bound).T
    b_fc = jax.random.uniform(k4, (1, nclass), jnp.float32, -bound, bound)
    # NOTE: gc1.weight_less is created by the module but never used in forward.
    return dict(W1=W1, b1=b1, W2=W2, b2=b2, W_fcT=W_fcT, b_fc=b_fc)


def make_gcn_forward(params, adj, *, nhid, nclass):
    """Pads/casts the static graph + weights ONCE and returns a jitted forward."""
    n_nodes = adj.shape[0]
    n3 = params["W2"].shape[1]
    bf = jnp.bfloat16

    NP = _round_up(n_nodes, 256)       # node (M and K) dim of the adj matmuls
    FH = _round_up(nhid, 128)
    F2 = _round_up(n3, 128)
    FC = _round_up(nclass, 128)

    # Resident-B gate: keep the (NP x 128) bf16 panel VMEM-resident only if its
    # double-buffered footprint leaves headroom on v7x (64 MiB physical / core).
    panel_bytes = 2 * NP * max(FH, F2) * 2
    b_resident = panel_bytes <= 20 * 1024 * 1024
    vmem_limit = 48 * 1024 * 1024      # > default scoped on v5e/v6e/v7x, < v7x physical

    # tm: bounded tiles; bigger tm when B must be re-streamed (cuts B traffic ~1/tm).
    tm = _pick_tile(NP, (256, 128) if b_resident else (1024, 512, 256, 128))
    if NP // tm < 2:                   # give both v7x TensorCores an i-block
        tm = max(tm // 2, 8)
    tk = _pick_tile(NP, (512, 256, 128))

    # ---- static, pre-padded / pre-cast operands (hoisted out of forward) ----
    adj_p = _pad_cast(adj, NP, NP, bf)             # ONCE per graph, not per call
    W1 = params["W1"].astype(jnp.float32)
    b1_p = _pad_cast(params["b1"], 1, FH, jnp.float32)
    W2_p = _pad_cast(params["W2"], FH, F2, bf)
    b2_p = _pad_cast(params["b2"], 1, F2, jnp.float32)
    WfcT_p = _pad_cast(params["W_fcT"], F2, FC, bf)
    bfc_p = _pad_cast(params["b_fc"], 1, FC, jnp.float32)
    static = (adj_p, W1, b1_p, W2_p, b2_p, WfcT_p, bfc_p)

    @jax.jit
    def _forward(x, adj_p, W1, b1_p, W2_p, b2_p, WfcT_p, bfc_p):
        # gc1 feature_less support = vstack(x, W1); only this depends on x.
        support = jnp.vstack([x, W1])                        # (n_nodes, nhid)
        support_p = _pad_cast(support, NP, FH, bf)
        x1_p, s2_p = _call_gc1_s2(adj_p, support_p, b1_p, W2_p,
                                  tm=tm, tk=tk, b_resident=b_resident,
                                  vmem_limit=vmem_limit)
        x2_p = _call_gc2_fc(adj_p, s2_p, b2_p, WfcT_p, bfc_p,
                            tm=tm, tk=tk, b_resident=b_resident,
                            vmem_limit=vmem_limit)
        return x1_p[:n_nodes, :nhid], x2_p[:n_nodes, :nclass]

    def forward(x):
        return _forward(x, *static)

    return forward


if __name__ == "__main__":
    nfeat, nhid, nclass = 16, 32, 4
    n_docs = 8
    N = n_docs + nfeat                 # adj is square over (docs + words)

    key = jax.random.PRNGKey(0)
    kx, kadj, kp = jax.random.split(key, 3)

    x = jax.random.normal(kx, (n_docs, nhid), jnp.float32)
    adj = jax.random.uniform(kadj, (N, N), jnp.float32)
    adj = adj / jnp.sum(adj, axis=1, keepdims=True)   # row-normalized dense adjacency

    params = init_gcn_params(kp, nfeat, nhid, nclass)

    forward = make_gcn_forward(params, adj, nhid=nhid, nclass=nclass)
    x1, x2 = forward(x)
    jax.block_until_ready((x1, x2))

    # Pure-JAX f32 reference (same math as the PyTorch module in eval mode).
    support = jnp.vstack([x, params["W1"]])
    x1_ref = jnp.maximum(adj @ support + params["b1"], 0.0)
    s2_ref = x1_ref @ params["W2"]
    h_ref = jnp.maximum(adj @ s2_ref + params["b2"], 0.0)
    x2_ref = jax.nn.sigmoid(h_ref @ params["W_fcT"] + params["b_fc"])

    assert x1.shape == (N, nhid) and x2.shape == (N, nclass)
    assert bool(jnp.all(jnp.isfinite(x1))) and bool(jnp.all(jnp.isfinite(x2)))
    assert bool(jnp.allclose(x1, x1_ref, atol=5e-2, rtol=5e-2))
    assert bool(jnp.allclose(x2, x2_ref, atol=5e-2, rtol=5e-2))
    print("KERNEL_OK")
</pallas_src>

<mosaic_0001>
module attributes {stable_mosaic.version = 11 : i64} {
  func.func @_gc1_s2_kernel(%arg0: i32, %arg1: i32, %arg2: memref<128x256xbf16, #tpu.memory_space<vmem>>, %arg3: memref<256x128xbf16, #tpu.memory_space<vmem>>, %arg4: memref<1x128xf32, #tpu.memory_space<vmem>>, %arg5: memref<128x128xbf16, #tpu.memory_space<vmem>>, %arg6: memref<128x128xf32, #tpu.memory_space<vmem>>, %arg7: memref<128x128xbf16, #tpu.memory_space<vmem>>, %arg8: memref<128x128xf32, #tpu.memory_space<vmem>>) attributes {dimension_semantics = [#tpu.dimension_semantics<parallel>, #tpu.dimension_semantics<arbitrary>], iteration_bounds = array<i64: 2, 1>, scalar_prefetch = 0 : i64, scratch_operands = 1 : i64, tpu.core_type = #tpu.core_type<tc>, window_params = [{transform_indices = @transform_0, window_bounds = array<i64: 128, 256>}, {pipeline_mode = #tpu.pipeline_mode<synchronous>, transform_indices = @transform_1, window_bounds = array<i64: 256, 128>}, {pipeline_mode = #tpu.pipeline_mode<synchronous>, transform_indices = @transform_2, window_bounds = array<i64: 1, 128>}, {pipeline_mode = #tpu.pipeline_mode<synchronous>, transform_indices = @transform_3, window_bounds = array<i64: 128, 128>}, {transform_indices = @transform_4, window_bounds = array<i64: 128, 128>}, {transform_indices = @transform_5, window_bounds = array<i64: 128, 128>}]} {
    %c0_i32 = arith.constant 0 : i32
    %0 = arith.cmpi eq, %arg1, %c0_i32 : i32
    %1 = arith.extui %0 : i1 to i32
    %c0_i32_0 = arith.constant 0 : i32
    %2 = arith.cmpi ne, %1, %c0_i32_0 : i32
    scf.if %2 {
      %cst_9 = arith.constant 0.000000e+00 : f32
      %15 = vector.broadcast %cst_9 : f32 to vector<128x128xf32>
      %c0_10 = arith.constant 0 : index
      %c0_11 = arith.constant 0 : index
      %16 = vector.load %arg8[%c0_10, %c0_11] : memref<128x128xf32, #tpu.memory_space<vmem>>, vector<128x128xf32>
      tpu.vector_store %arg8[%c0_10, %c0_11], %15 {strides = array<i32>} : memref<128x128xf32, #tpu.memory_space<vmem>>, vector<128x128xf32>,
    } else {
    }
    %c256_i32 = arith.constant 256 : i32
    %3 = arith.muli %arg1, %c256_i32 : i32
    %4 = tpu.assume_multiple %3, 256 : i32
    %5 = arith.index_cast %4 : i32 to index
    %c0 = arith.constant 0 : index
    %6 = vector.load %arg3[%5, %c0] : memref<256x128xbf16, #tpu.memory_space<vmem>>, vector<256x128xbf16>
    %c0_1 = arith.constant 0 : index
    %c0_2 = arith.constant 0 : index
    %7 = vector.load %arg8[%c0_1, %c0_2] : memref<128x128xf32, #tpu.memory_space<vmem>>, vector<128x128xf32>
    %c0_3 = arith.constant 0 : index
    %c0_4 = arith.constant 0 : index
    %8 = vector.load %arg2[%c0_3, %c0_4] : memref<128x256xbf16, #tpu.memory_space<vmem>>, vector<128x256xbf16>
    %cst = arith.constant dense<0.000000e+00> : vector<128x128xf32>
    %9 = tpu.matmul %8, %6, %cst {dimension_numbers = #tpu.dot_dimension_numbers<[1], [0], [0], [1], [0, 0, 1, 1], [], []>} : vector<128x256xbf16>, vector<256x128xbf16>, vector<128x128xf32> -> vector<128x128xf32>
    %10 = arith.addf %7, %9 : vector<128x128xf32>
    %c0_5 = arith.constant 0 : index
    %c0_6 = arith.constant 0 : index
    %11 = vector.load %arg8[%c0_5, %c0_6] : memref<128x128xf32, #tpu.memory_space<vmem>>, vector<128x128xf32>
    tpu.vector_store %arg8[%c0_5, %c0_6], %10 {strides = array<i32>} : memref<128x128xf32, #tpu.memory_space<vmem>>, vector<128x128xf32>,
    %c0_i32_7 = arith.constant 0 : i32
    %12 = arith.cmpi eq, %arg1, %c0_i32_7 : i32
    %13 = arith.extui %12 : i1 to i32
    %c0_i32_8 = arith.constant 0 : i32
    %14 = arith.cmpi ne, %13, %c0_i32_8 : i32
    scf.if %14 {
      %c0_9 = arith.constant 0 : index
      %c0_10 = arith.constant 0 : index
      %15 = vector.load %arg8[%c0_9, %c0_10] : memref<128x128xf32, #tpu.memory_space<vmem>>, vector<128x128xf32>
      %c0_11 = arith.constant 0 : index
      %c0_12 = arith.constant 0 : index
      %16 = vector.load %arg4[%c0_11, %c0_12] : memref<1x128xf32, #tpu.memory_space<vmem>>, vector<1x128xf32>
      %17 = vector.broadcast %16 : vector<1x128xf32> to vector<128x128xf32>
      %18 = arith.addf %15, %17 : vector<128x128xf32>
      %cst_13 = arith.constant 0.000000e+00 : f32
      %19 = vector.broadcast %cst_13 : f32 to vector<128x128xf32>
      %20 = arith.maximumf %18, %19 : vector<128x128xf32>
      %c0_14 = arith.constant 0 : index
      %c0_15 = arith.constant 0 : index
      %21 = vector.load %arg6[%c0_14, %c0_15] : memref<128x128xf32, #tpu.memory_space<vmem>>, vector<128x128xf32>
      tpu.vector_store %arg6[%c0_14, %c0_15], %20 {strides = array<i32>} : memref<128x128xf32, #tpu.memory_space<vmem>>, vector<128x128xf32>,
      %22 = arith.truncf %20 : vector<128x128xf32> to vector<128x128xbf16>
      %c0_16 = arith.constant 0 : index
      %c0_17 = arith.constant 0 : index
      %23 = vector.load %arg5[%c0_16, %c0_17] : memref<128x128xbf16, #tpu.memory_space<vmem>>, vector<128x128xbf16>
      %cst_18 = arith.constant dense<0.000000e+00> : vector<128x128xf32>
      %24 = tpu.matmul %22, %23, %cst_18 {dimension_numbers = #tpu.dot_dimension_numbers<[1], [0], [0], [1], [0, 0, 1, 1], [], []>} : vector<128x128xbf16>, vector<128x128xbf16>, vector<128x128xf32> -> vector<128x128xf32>
      %25 = arith.truncf %24 : vector<128x128xf32> to vector<128x128xbf16>
      %c0_19 = arith.constant 0 : index
      %c0_20 = arith.constant 0 : index
      %26 = vector.load %arg7[%c0_19, %c0_20] : memref<128x128xbf16, #tpu.memory_space<vmem>>, vector<128x128xbf16>
      tpu.vector_store %arg7[%c0_19, %c0_20], %25 {strides = array<i32>} : memref<128x128xbf16, #tpu.memory_space<vmem>>, vector<128x128xbf16>,
    } else {
    }
    return
  }
  func.func @transform_0(%arg0: i32, %arg1: i32) -> (i32, i32) {
    %c0_i32 = arith.constant 0 : i32
    return %arg0, %arg1 : i32, i32
  }
  func.func @transform_1(%arg0: i32, %arg1: i32) -> (i32, i32) {
    %c0_i32 = arith.constant 0 : i32
    %c0_i32_0 = arith.constant 0 : i32
    %c0_i32_1 = arith.constant 0 : i32
    return %c0_i32, %c0_i32_0 : i32, i32
  }
  func.func @transform_2(%arg0: i32, %arg1: i32) -> (i32, i32) {
    %c0_i32 = arith.constant 0 : i32
    %c0_i32_0 = arith.constant 0 : i32
    %c0_i32_1 = arith.constant 0 : i32
    return %c0_i32, %c0_i32_0 : i32, i32
  }
  func.func @transform_3(%arg0: i32, %arg1: i32) -> (i32, i32) {
    %c0_i32 = arith.constant 0 : i32
    %c0_i32_0 = arith.constant 0 : i32
    %c0_i32_1 = arith.constant 0 : i32
    return %c0_i32, %c0_i32_0 : i32, i32
  }
  func.func @transform_4(%arg0: i32, %arg1: i32) -> (i32, i32) {
    %c0_i32 = arith.constant 0 : i32
    %c0_i32_0 = arith.constant 0 : i32
    return %arg0, %c0_i32 : i32, i32
  }
  func.func @transform_5(%arg0: i32, %arg1: i32) -> (i32, i32) {
    %c0_i32 = arith.constant 0 : i32
    %c0_i32_0 = arith.constant 0 : i32
    return %arg0, %c0_i32 : i32, i32
  }
}

module attributes {stable_mosaic.version = 11 : i64} {
  func.func @_gc2_fc_kernel(%arg0: i32, %arg1: i32, %arg2: memref<128x256xbf16, #tpu.memory_space<vmem>>, %arg3: memref<256x128xbf16, #tpu.memory_space<vmem>>, %arg4: memref<1x128xf32, #tpu.memory_space<vmem>>, %arg5: memref<128x128xbf16, #tpu.memory_space<vmem>>, %arg6: memref<1x128xf32, #tpu.memory_space<vmem>>, %arg7: memref<128x128xf32, #tpu.memory_space<vmem>>, %arg8: memref<128x128xf32, #tpu.memory_space<vmem>>) attributes {dimension_semantics = [#tpu.dimension_semantics<parallel>, #tpu.dimension_semantics<arbitrary>], iteration_bounds = array<i64: 2, 1>, scalar_prefetch = 0 : i64, scratch_operands = 1 : i64, tpu.core_type = #tpu.core_type<tc>, window_params = [{transform_indices = @transform_0, window_bounds = array<i64: 128, 256>}, {pipeline_mode = #tpu.pipeline_mode<synchronous>, transform_indices = @transform_1, window_bounds = array<i64: 256, 128>}, {pipeline_mode = #tpu.pipeline_mode<synchronous>, transform_indices = @transform_2, window_bounds = array<i64: 1, 128>}, {pipeline_mode = #tpu.pipeline_mode<synchronous>, transform_indices = @transform_3, window_bounds = array<i64: 128, 128>}, {pipeline_mode = #tpu.pipeline_mode<synchronous>, transform_indices = @transform_4, window_bounds = array<i64: 1, 128>}, {transform_indices = @transform_5, window_bounds = array<i64: 128, 128>}]} {
    %c0_i32 = arith.constant 0 : i32
    %0 = arith.cmpi eq, %arg1, %c0_i32 : i32
    %1 = arith.extui %0 : i1 to i32
    %c0_i32_0 = arith.constant 0 : i32
    %2 = arith.cmpi ne, %1, %c0_i32_0 : i32
    scf.if %2 {
      %cst_9 = arith.constant 0.000000e+00 : f32
      %15 = vector.broadcast %cst_9 : f32 to vector<128x128xf32>
      %c0_10 = arith.constant 0 : index
      %c0_11 = arith.constant 0 : index
      %16 = vector.load %arg8[%c0_10, %c0_11] : memref<128x128xf32, #tpu.memory_space<vmem>>, vector<128x128xf32>
      tpu.vector_store %arg8[%c0_10, %c0_11], %15 {strides = array<i32>} : memref<128x128xf32, #tpu.memory_space<vmem>>, vector<128x128xf32>,
    } else {
    }
    %c256_i32 = arith.constant 256 : i32
    %3 = arith.muli %arg1, %c256_i32 : i32
    %4 = tpu.assume_multiple %3, 256 : i32
    %5 = arith.index_cast %4 : i32 to index
    %c0 = arith.constant 0 : index
    %6 = vector.load %arg3[%5, %c0] : memref<256x128xbf16, #tpu.memory_space<vmem>>, vector<256x128xbf16>
    %c0_1 = arith.constant 0 : index
    %c0_2 = arith.constant 0 : index
    %7 = vector.load %arg8[%c0_1, %c0_2] : memref<128x128xf32, #tpu.memory_space<vmem>>, vector<128x128xf32>
    %c0_3 = arith.constant 0 : index
    %c0_4 = arith.constant 0 : index
    %8 = vector.load %arg2[%c0_3, %c0_4] : memref<128x256xbf16, #tpu.memory_space<vmem>>, vector<128x256xbf16>
    %cst = arith.constant dense<0.000000e+00> : vector<128x128xf32>
    %9 = tpu.matmul %8, %6, %cst {dimension_numbers = #tpu.dot_dimension_numbers<[1], [0], [0], [1], [0, 0, 1, 1], [], []>} : vector<128x256xbf16>, vector<256x128xbf16>, vector<128x128xf32> -> vector<128x128xf32>
    %10 = arith.addf %7, %9 : vector<128x128xf32>
    %c0_5 = arith.constant 0 : index
    %c0_6 = arith.constant 0 : index
    %11 = vector.load %arg8[%c0_5, %c0_6] : memref<128x128xf32, #tpu.memory_space<vmem>>, vector<128x128xf32>
    tpu.vector_store %arg8[%c0_5, %c0_6], %10 {strides = array<i32>} : memref<128x128xf32, #tpu.memory_space<vmem>>, vector<128x128xf32>,
    %c0_i32_7 = arith.constant 0 : i32
    %12 = arith.cmpi eq, %arg1, %c0_i32_7 : i32
    %13 = arith.extui %12 : i1 to i32
    %c0_i32_8 = arith.constant 0 : i32
    %14 = arith.cmpi ne, %13, %c0_i32_8 : i32
    scf.if %14 {
      %c0_9 = arith.constant 0 : index
      %c0_10 = arith.constant 0 : index
      %15 = vector.load %arg8[%c0_9, %c0_10] : memref<128x128xf32, #tpu.memory_space<vmem>>, vector<128x128xf32>
      %c0_11 = arith.constant 0 : index
      %c0_12 = arith.constant 0 : index
      %16 = vector.load %arg4[%c0_11, %c0_12] : memref<1x128xf32, #tpu.memory_space<vmem>>, vector<1x128xf32>
      %17 = vector.broadcast %16 : vector<1x128xf32> to vector<128x128xf32>
      %18 = arith.addf %15, %17 : vector<128x128xf32>
      %cst_13 = arith.constant 0.000000e+00 : f32
      %19 = vector.broadcast %cst_13 : f32 to vector<128x128xf32>
      %20 = arith.maximumf %18, %19 : vector<128x128xf32>
      %21 = arith.truncf %20 : vector<128x128xf32> to vector<128x128xbf16>
      %c0_14 = arith.constant 0 : index
      %c0_15 = arith.constant 0 : index
      %22 = vector.load %arg5[%c0_14, %c0_15] : memref<128x128xbf16, #tpu.memory_space<vmem>>, vector<128x128xbf16>
      %cst_16 = arith.constant dense<0.000000e+00> : vector<128x128xf32>
      %23 = tpu.matmul %21, %22, %cst_16 {dimension_numbers = #tpu.dot_dimension_numbers<[1], [0], [0], [1], [0, 0, 1, 1], [], []>} : vector<128x128xbf16>, vector<128x128xbf16>, vector<128x128xf32> -> vector<128x128xf32>
      %c0_17 = arith.constant 0 : index
      %c0_18 = arith.constant 0 : index
      %24 = vector.load %arg6[%c0_17, %c0_18] : memref<1x128xf32, #tpu.memory_space<vmem>>, vector<1x128xf32>
      %25 = vector.broadcast %24 : vector<1x128xf32> to vector<128x128xf32>
      %26 = arith.addf %23, %25 : vector<128x128xf32>
      %27 = arith.negf %26 : vector<128x128xf32>
      %28 = math.exp %27 : vector<128x128xf32>
      %cst_19 = arith.constant 1.000000e+00 : f32
      %29 = vector.broadcast %cst_19 : f32 to vector<128x128xf32>
      %30 = arith.addf %29, %28 : vector<128x128xf32>
      %31 = arith.divf %29, %30 : vector<128x128xf32>
      %c0_20 = arith.constant 0 : index
      %c0_21 = arith.constant 0 : index
      %32 = vector.load %arg7[%c0_20, %c0_21] : memref<128x128xf32, #tpu.memory_space<vmem>>, vector<128x128xf32>
      tpu.vector_store %arg7[%c0_20, %c0_21], %31 {strides = array<i32>} : memref<128x128xf32, #tpu.memory_space<vmem>>, vector<128x128xf32>,
    } else {
    }
    return
  }
  func.func @transform_0(%arg0: i32, %arg1: i32) -> (i32, i32) {
    %c0_i32 = arith.constant 0 : i32
    return %arg0, %arg1 : i32, i32
  }
  func.func @transform_1(%arg0: i32, %arg1: i32) -> (i32, i32) {
    %c0_i32 = arith.constant 0 : i32
    %c0_i32_0 = arith.constant 0 : i32
    %c0_i32_1 = arith.constant 0 : i32
    return %c0_i32, %c0_i32_0 : i32, i32
  }
  func.func @transform_2(%arg0: i32, %arg1: i32) -> (i32, i32) {
    %c0_i32 = arith.constant 0 : i32
    %c0_i32_0 = arith.constant 0 : i32
    %c0_i32_1 = arith.constant 0 : i32
    return %c0_i32, %c0_i32_0 : i32, i32
  }
  func.func @transform_3(%arg0: i32, %arg1: i32) -> (i32, i32) {
    %c0_i32 = arith.constant 0 : i32
    %c0_i32_0 = arith.constant 0 : i32
    %c0_i32_1 = arith.constant 0 : i32
    return %c0_i32, %c0_i32_0 : i32, i32
  }
  func.func @transform_4(%arg0: i32, %arg1: i32) -> (i32, i32) {
    %c0_i32 = arith.constant 0 : i32
    %c0_i32_0 = arith.constant 0 : i32
    %c0_i32_1 = arith.constant 0 : i32
    return %c0_i32, %c0_i32_0 : i32, i32
  }
  func.func @transform_5(%arg0: i32, %arg1: i32) -> (i32, i32) {
    %c0_i32 = arith.constant 0 : i32
    %c0_i32_0 = arith.constant 0 : i32
    return %arg0, %c0_i32 : i32, i32
  }
}

</mosaic_0001>

<llo_original>
// kernel: _forward.2
$region0: #{_forward.2}
  #allocation0 [shape = 'u32[]', space=smem, size = 0x4, offset = 0x4, fixed_abs, tag = 'smem constant byte address 0x4 - core index']
  #allocation1 [shape = 'u32[144,128]{1,0:T(1,128)}', space=vmem, size = 0x12000, scoped, tag = 'internal scratch']
  #allocation2 [shape = 'f32[128,128]{1,0:T(8,128)}', space=vmem, size = 0x10000, scoped, tag = 'scratch operand']
  %s0 = inlined_call_operand.hbm [shape: bf16[256,256], index: 0, kind: input, shape index: {}]
  %s1 = inlined_call_operand.vmem [shape: bf16[256,128], index: 1, kind: input, shape index: {}]
  %s2 = inlined_call_operand.vmem [shape: f32[1,128], index: 2, kind: input, shape index: {}]
  %s3 = inlined_call_operand.vmem [shape: bf16[128,128], index: 3, kind: input, shape index: {}]
  %s4 = inlined_call_operand.vmem [shape: f32[256,128], index: 4, kind: output, shape index: {0}]
  %s5 = inlined_call_operand.vmem [shape: bf16[256,128], index: 5, kind: output, shape index: {1}]
  %6 = xla_tuple %s4, %s5
  %s7 = sld [smem:[#allocation0]]
  $region69: #{_forward.2} parent=0
    _
  %s9 = ssub.s32 1, %s7
  %s10 = scalar_select 0, %s9, %s7
  $region1: #{_forward.2} parent=0
    #allocation3 [shape = 'u8[131072]{0}', space=vmem, size = 0x20000, scoped, tag = 'input window, operand 0']
    #allocation4 [shape = 's32[2]{0}', space=sflag, size = 0x8, scoped, tag = 'scoped memory for _forward.2']
    %11 = vsyncpa [#allocation4], 0
    %s12 = scalar_lea.sflag [#allocation4], 1
    %13 = vsyncpa %s12, 0
    loop: start=0, step=1, limit=4
    $region2: #{_forward.2} parent=1 // loop_pre_header
      _
    $region3: #{_forward.2} parent=1 // loop_header
      %s15 = sphi 0, %s19
      %p16 = scmp.ge.s32.totalorder %s15, 4
      %s22 = sphi 0, %s34
      %s23 = sphi 0, %s30
      %s24 = sphi 0, %s22
      %s25 = sphi 0, %s23
      %s26 = sphi 0, %s24
      %s27 = sphi 0, %s25
      %s39 = sphi 0, %s41
      %s42 = sphi 0, %s39
      %s43 = sphi 0, %s42
      %s59 = sphi 0, %s43
      %s63 = sphi 0, %s63
      %s65 = sphi 0, %s63
      %s66 = sphi 0, %s65
      %s80 = sphi 0, %s66
      %s84 = sphi 0, %s84
      %s86 = sphi 0, %s84
      %s87 = sphi 0, %s86
      %s101 = sphi 0, %s87
      %s105 = sphi 0, %s105
      %s107 = sphi 0, %s105
      %s108 = sphi 0, %s107
      %s122 = sphi 0, %s108
      %s128 = sphi 0, %s130
      %s131 = sphi 0, %s128
      %s132 = sphi 0, %s131
      %s148 = sphi 0, %s132
      %s154 = sphi 0, %s156
      %s157 = sphi 0, %s154
      %s158 = sphi 0, %s157
      %s174 = sphi 0, %s158
    $region4: #{_forward.2} parent=1 // loop_header_branch
      %18 = sbr.rel (%p16) target = $region8
    $region5: #{_forward.2} parent=1 // loop_body
      %s20 = ssub.s32 %s15, 1
      %s21 = ssub.s32 %s15, 2
      %s28 = sadd.s32 1, %s23
      %p29 = scmp.ge.s32.totalorder %s28, 1
      %s30 = scalar_select %p29, 0, %s28
      %s31 = sadd.s32 1, %s22
      %s32 = scalar_select %p29, %s31, %s22
      %p33 = scmp.ge.s32.totalorder %s32, 2
      %s34 = scalar_select %p33, 0, %s32
      %s35 = ssub.s32 %s22, %s34
      %s36 = ssub.s32 %s23, %s30
      %s37 = sor.u32 %s35, %s36
      %p38 = scmp.eq.s32.totalorder %s37, 0
      %s40 = sadd.s32 %s39, 1
      %s41 = scalar_select %p38, %s39, %s40
      %p44 = pneg %p38
      %p45 = scmp.eq.s32.totalorder %s15, 1
      %p46 = por %p44, %p45
      %p47 = scmp.ne.s32.totalorder %s39, %s42
      %p48 = scmp.eq.s32.totalorder %s15, 0
      %p49 = por %p47, %p48
      %p50 = scmp.ne.s32.totalorder %s39, %s42
      %p51 = scmp.eq.s32.totalorder %s20, 1
      %p52 = por %p50, %p51
      %p53 = scmp.ne.s32.totalorder %s42, %s43
      %p54 = scmp.eq.s32.totalorder %s20, 0
      %p55 = por %p53, %p54
      %p56 = scmp.ne.s32.totalorder %s42, %s43
      %p57 = scmp.eq.s32.totalorder %s21, 1
      %p58 = por %p56, %p57
      %p60 = scmp.ne.s32.totalorder %s43, %s59
      %p61 = scmp.eq.s32.totalorder %s21, 0
      %p62 = por %p60, %p61
      %s64 = sadd.s32 %s63, 1
      %p67 = scmp.eq.s32.totalorder %s15, 1
      %p68 = scmp.ne.s32.totalorder %s63, %s65
      %p69 = scmp.eq.s32.totalorder %s15, 0
      %p70 = por %p68, %p69
      %p71 = scmp.ne.s32.totalorder %s63, %s65
      %p72 = scmp.eq.s32.totalorder %s20, 1
      %p73 = por %p71, %p72
      %p74 = scmp.ne.s32.totalorder %s65, %s66
      %p75 = scmp.eq.s32.totalorder %s20, 0
      %p76 = por %p74, %p75
      %p77 = scmp.ne.s32.totalorder %s65, %s66
      %p78 = scmp.eq.s32.totalorder %s21, 1
      %p79 = por %p77, %p78
      %p81 = scmp.ne.s32.totalorder %s66, %s80
      %p82 = scmp.eq.s32.totalorder %s21, 0
      %p83 = por %p81, %p82
      %s85 = sadd.s32 %s84, 1
      %p88 = scmp.eq.s32.totalorder %s15, 1
      %p89 = scmp.ne.s32.totalorder %s84, %s86
      %p90 = scmp.eq.s32.totalorder %s15, 0
      %p91 = por %p89, %p90
      %p92 = scmp.ne.s32.totalorder %s84, %s86
      %p93 = scmp.eq.s32.totalorder %s20, 1
      %p94 = por %p92, %p93
      %p95 = scmp.ne.s32.totalorder %s86, %s87
      %p96 = scmp.eq.s32.totalorder %s20, 0
      %p97 = por %p95, %p96
      %p98 = scmp.ne.s32.totalorder %s86, %s87
      %p99 = scmp.eq.s32.totalorder %s21, 1
      %p100 = por %p98, %p99
      %p102 = scmp.ne.s32.totalorder %s87, %s101
      %p103 = scmp.eq.s32.totalorder %s21, 0
      %p104 = por %p102, %p103
      %s106 = sadd.s32 %s105, 1
      %p109 = scmp.eq.s32.totalorder %s15, 1
      %p110 = scmp.ne.s32.totalorder %s105, %s107
      %p111 = scmp.eq.s32.totalorder %s15, 0
      %p112 = por %p110, %p111
      %p113 = scmp.ne.s32.totalorder %s105, %s107
      %p114 = scmp.eq.s32.totalorder %s20, 1
      %p115 = por %p113, %p114
      %p116 = scmp.ne.s32.totalorder %s107, %s108
      %p117 = scmp.eq.s32.totalorder %s20, 0
      %p118 = por %p116, %p117
      %p119 = scmp.ne.s32.totalorder %s107, %s108
      %p120 = scmp.eq.s32.totalorder %s21, 1
      %p121 = por %p119, %p120
      %p123 = scmp.ne.s32.totalorder %s108, %s122
      %p124 = scmp.eq.s32.totalorder %s21, 0
      %p125 = por %p123, %p124
      %s126 = ssub.s32 %s22, %s34
      %p127 = scmp.eq.s32.totalorder %s126, 0
      %s129 = sadd.s32 %s128, 1
      %s130 = scalar_select %p127, %s128, %s129
      %p133 = pneg %p127
      %p134 = scmp.eq.s32.totalorder %s15, 1
      %p135 = por %p133, %p134
      %p136 = scmp.ne.s32.totalorder %s128, %s131
      %p137 = scmp.eq.s32.totalorder %s15, 0
      %p138 = por %p136, %p137
      %p139 = scmp.ne.s32.totalorder %s128, %s131
      %p140 = scmp.eq.s32.totalorder %s20, 1
      %p141 = por %p139, %p140
      %p142 = scmp.ne.s32.totalorder %s131, %s132
      %p143 = scmp.eq.s32.totalorder %s20, 0
      %p144 = por %p142, %p143
      %p145 = scmp.ne.s32.totalorder %s131, %s132
      %p146 = scmp.eq.s32.totalorder %s21, 1
      %p147 = por %p145, %p146
      %p149 = scmp.ne.s32.totalorder %s132, %s148
      %p150 = scmp.eq.s32.totalorder %s21, 0
      %p151 = por %p149, %p150
      %s152 = ssub.s32 %s22, %s34
      %p153 = scmp.eq.s32.totalorder %s152, 0
      %s155 = sadd.s32 %s154, 1
      %s156 = scalar_select %p153, %s154, %s155
      %p159 = pneg %p153
      %p160 = scmp.eq.s32.totalorder %s15, 1
      %p161 = por %p159, %p160
      %p162 = scmp.ne.s32.totalorder %s154, %s157
      %p163 = scmp.eq.s32.totalorder %s15, 0
      %p164 = por %p162, %p163
      %p165 = scmp.ne.s32.totalorder %s154, %s157
      %p166 = scmp.eq.s32.totalorder %s20, 1
      %p167 = por %p165, %p166
      %p168 = scmp.ne.s32.totalorder %s157, %s158
      %p169 = scmp.eq.s32.totalorder %s20, 0
      %p170 = por %p168, %p169
      %p171 = scmp.ne.s32.totalorder %s157, %s158
      %p172 = scmp.eq.s32.totalorder %s21, 1
      %p173 = por %p171, %p172
      %p175 = scmp.ne.s32.totalorder %s158, %s174
      %p176 = scmp.eq.s32.totalorder %s21, 0
      %p177 = por %p175, %p176
      %p178 = scmp.le.s32.totalorder 1, %s15
      %p179 = scmp.lt.s32.totalorder %s15, 3
      %p180 = pnand %p178, %p179
      %p181 = pneg %p180
      // Predicated region
      $region9: #{_forward.2} parent=5 // pred_check
        _
      $region10: #{_forward.2} parent=5 // pred_check_branch
        %183 = sbr.rel (%p180) target = $region12
      $region11: #{_forward.2} parent=5 // pred_region
        %s184 = ssub.s32 %s15, 1
        // Predicated region
        $region13: #{_forward.2} parent=11 // pred_check
          %p185 = pneg %p76
        $region14: #{_forward.2} parent=11 // pred_check_branch
          %187 = sbr.rel (%p185) target = $region16
        $region15: #{_forward.2} parent=11 // pred_region
          _
        $region16: #{_forward.2} parent=11 // pred_fallthru
          _
        // Predicated region
        $region17: #{_forward.2} parent=11 // pred_check
          %p188 = pneg %p97
        $region18: #{_forward.2} parent=11 // pred_check_branch
          %190 = sbr.rel (%p188) target = $region20
        $region19: #{_forward.2} parent=11 // pred_region
          _
        $region20: #{_forward.2} parent=11 // pred_fallthru
          _
        // Predicated region
        $region21: #{_forward.2} parent=11 // pred_check
          %p191 = pneg %p118
        $region22: #{_forward.2} parent=11 // pred_check_branch
          %193 = sbr.rel (%p191) target = $region24
        $region23: #{_forward.2} parent=11 // pred_region
          _
        $region24: #{_forward.2} parent=11 // pred_fallthru
          _
      $region12: #{_forward.2} parent=5 // pred_fallthru
        _
      %p194 = scmp.lt.s32.totalorder %s15, 2
      // Predicated region
      $region25: #{_forward.2} parent=5 // pred_check
        %p195 = pneg %p194
      $region26: #{_forward.2} parent=5 // pred_check_branch
        %197 = sbr.rel (%p195) target = $region28
      $region27: #{_forward.2} parent=5 // pred_region
        // Predicated region
        $region29: #{_forward.2} parent=27 // pred_check
          %p198 = pneg %p49
        $region30: #{_forward.2} parent=27 // pred_check_branch
          %200 = sbr.rel (%p198) target = $region32
        $region31: #{_forward.2} parent=27 // pred_region
          %s201 = sand.u32 %s39, 1
          %s202 = scalar_lea.sflag [#allocation4], %s201
          %s203 = sand.u32 %s39, 1
          %s204 = smul.addr %s203, 128
          %s205 = scalar_lea.vmem [#allocation3], %s204
          %s206 = smul.u32 16, %s22
          %s207 = smul.u32 2, %s23
          %s209 = ssub.s32 2048, 2048
          %210 = vsyncadd %s202, %s209
          %s211 = smul.addr %s206, 2
          %s212 = sadd.s32 %s207, %s211
          %s213 = smul.addr %s212, 64
          %s214 = scalar_lea.hbm %s0, %s213
          %s215 = sshll.u32 %s205, 4
          %s216 = int_to_ptr.vmem [resolvable:$true] %s215
          %221 = dma.hbm_to_vmem [thread:$0]  %s214, 2048, %s216, %s202, 128, 128, 8
        $region32: #{_forward.2} parent=27 // pred_fallthru
          _
      $region28: #{_forward.2} parent=5 // pred_fallthru
        _
      %p222 = scmp.le.s32.totalorder 1, %s15
      %p223 = scmp.lt.s32.totalorder %s15, 3
      %p224 = pnand %p222, %p223
      %p225 = pneg %p224
      // Predicated region
      $region33: #{_forward.2} parent=5 // pred_check
        _
      $region34: #{_forward.2} parent=5 // pred_check_branch
        %227 = sbr.rel (%p224) target = $region36
      $region35: #{_forward.2} parent=5 // pred_region
        %s228 = ssub.s32 %s15, 1
        %s229 = sand.u32 %s42, 1
        %s230 = scalar_lea.sflag [#allocation4], %s229
        %s231 = sand.u32 %s42, 1
        %s232 = smul.addr %s231, 128
        %s233 = scalar_lea.vmem [#allocation3], %s232
        // Predicated region
        $region37: #{_forward.2} parent=35 // pred_check
          %p234 = pneg %p55
        $region38: #{_forward.2} parent=35 // pred_check_branch
          %236 = sbr.rel (%p234) target = $region40
        $region39: #{_forward.2} parent=35 // pred_region
          %237 = dma.done %s230, 2048
        $region40: #{_forward.2} parent=35 // pred_fallthru
          _
        %s238 = sand.u32 %s42, 1
        %s239 = scalar_lea.sflag [#allocation4], %s238
        %s240 = sand.u32 %s42, 1
        %s241 = smul.addr %s240, 128
        %s242 = scalar_lea.vmem [#allocation3], %s241
        %p243 = pneg %p55
        %p244 = pneg %p52
        %p245 = pneg %p76
        %p246 = pneg %p73
        %p247 = pneg %p97
        %p248 = pneg %p94
        %p249 = pneg %p118
        %p250 = pneg %p115
        %p251 = pneg %p144
        %p252 = pneg %p141
        %s253 = smul.u32 16, %s24
        %p254 = scmp.lt.s32.totalorder %s253, 31
        %s255 = scalar_select %p254, %s253, 31
        %s256 = smul.addr %s255, 8
        %s257 = scalar_lea.vmem %s4, %s256
        %p258 = pneg %p170
        %p259 = pneg %p167
        %s260 = smul.u32 16, %s24
        %p261 = scmp.lt.s32.totalorder %s260, 31
        %s262 = scalar_select %p261, %s260, 31
        %s263 = smul.addr %s262, 4
        %s264 = scalar_lea.vmem %s5, %s263
        %s265 = smul.u32 16, %s24
        %s266 = smul.u32 2, %s25
        %s267 = smul.u32 16, %s24
        %p268 = scmp.lt.s32.totalorder %s267, 31
        %s269 = scalar_select %p268, %s267, 31
        %s270 = smul.addr %s269, 8
        %s271 = scalar_lea.vmem %s4, %s270
        %s272 = smul.u32 16, %s24
        %s273 = smul.u32 16, %s24
        %p274 = scmp.lt.s32.totalorder %s273, 31
        %s275 = scalar_select %p274, %s273, 31
        %s276 = smul.addr %s275, 4
        %s277 = scalar_lea.vmem %s5, %s276
        %s278 = smul.u32 16, %s24
        %p280 = scmp.eq.s32.totalorder %s25, 0
        // Predicated region
        $region41: #{_forward.2} parent=35 // pred_check
          %p281 = pneg %p280
        $region42: #{_forward.2} parent=35 // pred_check_branch
          %283 = sbr.rel (%p281) target = $region44
        $region43: #{_forward.2} parent=35 // pred_region
          %284 = vst [vmem:[#allocation2] sm:$0xff] 0.0
          %285 = vst [vmem:[#allocation2 + $0x8] sm:$0xff] 0.0
          %286 = vst [vmem:[#allocation2 + $0x10] sm:$0xff] 0.0
          %287 = vst [vmem:[#allocation2 + $0x18] sm:$0xff] 0.0
          %288 = vst [vmem:[#allocation2 + $0x20] sm:$0xff] 0.0
          %289 = vst [vmem:[#allocation2 + $0x28] sm:$0xff] 0.0
          %290 = vst [vmem:[#allocation2 + $0x30] sm:$0xff] 0.0
          %291 = vst [vmem:[#allocation2 + $0x38] sm:$0xff] 0.0
          %292 = vst [vmem:[#allocation2 + $0x40] sm:$0xff] 0.0
          %293 = vst [vmem:[#allocation2 + $0x48] sm:$0xff] 0.0
          %294 = vst [vmem:[#allocation2 + $0x50] sm:$0xff] 0.0
          %295 = vst [vmem:[#allocation2 + $0x58] sm:$0xff] 0.0
          %296 = vst [vmem:[#allocation2 + $0x60] sm:$0xff] 0.0
          %297 = vst [vmem:[#allocation2 + $0x68] sm:$0xff] 0.0
          %298 = vst [vmem:[#allocation2 + $0x70] sm:$0xff] 0.0
          %299 = vst [vmem:[#allocation2 + $0x78] sm:$0xff] 0.0
        $region44: #{_forward.2} parent=35 // pred_fallthru
          _
        %s300 = smul.u32 %s25, 256
        %s301 = sshra.s32 %s300, 3
        %s302 = sand.u32 %s300, 7
        %s303 = smul.addr %s301, 4
        %s304 = scalar_lea.vmem %s1, %s303
        %v305 = vld [vmem:[%s304] sm:$0xf]
        %v306 = vld [vmem:[%s304 + $0x4] sm:$0xf]
        %v307 = vld [vmem:[%s304 + $0x8] sm:$0xf]
        %v308 = vld [vmem:[%s304 + $0xc] sm:$0xf]
        %v309 = vld [vmem:[%s304 + $0x10] sm:$0xf]
        %v310 = vld [vmem:[%s304 + $0x14] sm:$0xf]
        %v311 = vld [vmem:[%s304 + $0x18] sm:$0xf]
        %v312 = vld [vmem:[%s304 + $0x1c] sm:$0xf]
        %v313 = vld [vmem:[%s304 + $0x20] sm:$0xf]
        %v314 = vld [vmem:[%s304 + $0x24] sm:$0xf]
        %v315 = vld [vmem:[%s304 + $0x28] sm:$0xf]
        %v316 = vld [vmem:[%s304 + $0x2c] sm:$0xf]
        %v317 = vld [vmem:[%s304 + $0x30] sm:$0xf]
        %v318 = vld [vmem:[%s304 + $0x34] sm:$0xf]
        %v319 = vld [vmem:[%s304 + $0x38] sm:$0xf]
        %v320 = vld [vmem:[%s304 + $0x3c] sm:$0xf]
        %v321 = vld [vmem:[%s304 + $0x40] sm:$0xf]
        %v322 = vld [vmem:[%s304 + $0x44] sm:$0xf]
        %v323 = vld [vmem:[%s304 + $0x48] sm:$0xf]
        %v324 = vld [vmem:[%s304 + $0x4c] sm:$0xf]
        %v325 = vld [vmem:[%s304 + $0x50] sm:$0xf]
        %v326 = vld [vmem:[%s304 + $0x54] sm:$0xf]
        %v327 = vld [vmem:[%s304 + $0x58] sm:$0xf]
        %v328 = vld [vmem:[%s304 + $0x5c] sm:$0xf]
        %v329 = vld [vmem:[%s304 + $0x60] sm:$0xf]
        %v330 = vld [vmem:[%s304 + $0x64] sm:$0xf]
        %v331 = vld [vmem:[%s304 + $0x68] sm:$0xf]
        %v332 = vld [vmem:[%s304 + $0x6c] sm:$0xf]
        %v333 = vld [vmem:[%s304 + $0x70] sm:$0xf]
        %v334 = vld [vmem:[%s304 + $0x74] sm:$0xf]
        %v335 = vld [vmem:[%s304 + $0x78] sm:$0xf]
        %v336 = vld [vmem:[%s304 + $0x7c] sm:$0xf]
        %v337 = vld [vmem:[#allocation2] sm:$0xff]
        %v338 = vld [vmem:[#allocation2 + $0x8] sm:$0xff]
        %v339 = vld [vmem:[#allocation2 + $0x10] sm:$0xff]
        %v340 = vld [vmem:[#allocation2 + $0x18] sm:$0xff]
        %v341 = vld [vmem:[#allocation2 + $0x20] sm:$0xff]
        %v342 = vld [vmem:[#allocation2 + $0x28] sm:$0xff]
        %v343 = vld [vmem:[#allocation2 + $0x30] sm:$0xff]
        %v344 = vld [vmem:[#allocation2 + $0x38] sm:$0xff]
        %v345 = vld [vmem:[#allocation2 + $0x40] sm:$0xff]
        %v346 = vld [vmem:[#allocation2 + $0x48] sm:$0xff]
        %v347 = vld [vmem:[#allocation2 + $0x50] sm:$0xff]
        %v348 = vld [vmem:[#allocation2 + $0x58] sm:$0xff]
        %v349 = vld [vmem:[#allocation2 + $0x60] sm:$0xff]
        %v350 = vld [vmem:[#allocation2 + $0x68] sm:$0xff]
        %v351 = vld [vmem:[#allocation2 + $0x70] sm:$0xff]
        %v352 = vld [vmem:[#allocation2 + $0x78] sm:$0xff]
        %v353 = vld [vmem:[%s233] sm:$0xff]
        %v354 = vld [vmem:[%s233 + $0x8] sm:$0xff]
        %v355 = vld [vmem:[%s233 + $0x10] sm:$0xff]
        %v356 = vld [vmem:[%s233 + $0x18] sm:$0xff]
        %v357 = vld [vmem:[%s233 + $0x20] sm:$0xff]
        %v358 = vld [vmem:[%s233 + $0x28] sm:$0xff]
        %v359 = vld [vmem:[%s233 + $0x30] sm:$0xff]
        %v360 = vld [vmem:[%s233 + $0x38] sm:$0xff]
        %v361 = vld [vmem:[%s233 + $0x40] sm:$0xff]
        %v362 = vld [vmem:[%s233 + $0x48] sm:$0xff]
        %v363 = vld [vmem:[%s233 + $0x50] sm:$0xff]
        %v364 = vld [vmem:[%s233 + $0x58] sm:$0xff]
        %v365 = vld [vmem:[%s233 + $0x60] sm:$0xff]
        %v366 = vld [vmem:[%s233 + $0x68] sm:$0xff]
        %v367 = vld [vmem:[%s233 + $0x70] sm:$0xff]
        %v368 = vld [vmem:[%s233 + $0x78] sm:$0xff]
        %v385 = vunpack.c.l.b16 %v353
        %v386 = vunpack.c.h.b16 %v353
        %v387 = vunpack.c.l.b16 %v354
        %v388 = vunpack.c.h.b16 %v354
        %v389 = vunpack.c.l.b16 %v355
        %v390 = vunpack.c.h.b16 %v355
        %v391 = vunpack.c.l.b16 %v356
        %v392 = vunpack.c.h.b16 %v356
        %v393 = vunpack.c.l.b16 %v357
        %v394 = vunpack.c.h.b16 %v357
        %v395 = vunpack.c.l.b16 %v358
        %v396 = vunpack.c.h.b16 %v358
        %v397 = vunpack.c.l.b16 %v359
        %v398 = vunpack.c.h.b16 %v359
        %v399 = vunpack.c.l.b16 %v360
        %v400 = vunpack.c.h.b16 %v360
        %v401 = vunpack.c.l.b16 %v361
        %v402 = vunpack.c.h.b16 %v361
        %v403 = vunpack.c.l.b16 %v362
        %v404 = vunpack.c.h.b16 %v362
        %v405 = vunpack.c.l.b16 %v363
        %v406 = vunpack.c.h.b16 %v363
        %v407 = vunpack.c.l.b16 %v364
        %v408 = vunpack.c.h.b16 %v364
        %v409 = vunpack.c.l.b16 %v365
        %v410 = vunpack.c.h.b16 %v365
        %v411 = vunpack.c.l.b16 %v366
        %v412 = vunpack.c.h.b16 %v366
        %v413 = vunpack.c.l.b16 %v367
        %v414 = vunpack.c.h.b16 %v367
        %v415 = vunpack.c.l.b16 %v368
        %v416 = vunpack.c.h.b16 %v368
        %v417 = vpack.c.b16 %v387, %v385
        %v418 = vpack.c.b16 %v388, %v386
        %v419 = vpack.c.b16 %v391, %v389
        %v420 = vpack.c.b16 %v392, %v390
        %v421 = vpack.c.b16 %v395, %v393
        %v422 = vpack.c.b16 %v396, %v394
        %v423 = vpack.c.b16 %v399, %v397
        %v424 = vpack.c.b16 %v400, %v398
        %v425 = vpack.c.b16 %v403, %v401
        %v426 = vpack.c.b16 %v404, %v402
        %v427 = vpack.c.b16 %v407, %v405
        %v428 = vpack.c.b16 %v408, %v406
        %v429 = vpack.c.b16 %v411, %v409
        %v430 = vpack.c.b16 %v412, %v410
        %v431 = vpack.c.b16 %v415, %v413
        %v432 = vpack.c.b16 %v416, %v414
        %v481 = vunpack.c.l.b16 %v305
        %v482 = vunpack.c.l.b16 %v306
        %v483 = vunpack.c.l.b16 %v307
        %v484 = vunpack.c.l.b16 %v308
        %v485 = vunpack.c.l.b16 %v309
        %v486 = vunpack.c.l.b16 %v310
        %v487 = vunpack.c.l.b16 %v311
        %v488 = vunpack.c.l.b16 %v312
        %v489 = vunpack.c.l.b16 %v313
        %v490 = vunpack.c.l.b16 %v314
        %v491 = vunpack.c.l.b16 %v315
        %v492 = vunpack.c.l.b16 %v316
        %v493 = vunpack.c.l.b16 %v317
        %v494 = vunpack.c.l.b16 %v318
        %v495 = vunpack.c.l.b16 %v319
        %v496 = vunpack.c.l.b16 %v320
        %v497 = vunpack.c.l.b16 %v321
        %v498 = vunpack.c.l.b16 %v322
        %v499 = vunpack.c.l.b16 %v323
        %v500 = vunpack.c.l.b16 %v324
        %v501 = vunpack.c.l.b16 %v325
        %v502 = vunpack.c.l.b16 %v326
        %v503 = vunpack.c.l.b16 %v327
        %v504 = vunpack.c.l.b16 %v328
        %v505 = vunpack.c.l.b16 %v329
        %v506 = vunpack.c.l.b16 %v330
        %v507 = vunpack.c.l.b16 %v331
        %v508 = vunpack.c.l.b16 %v332
        %v509 = vunpack.c.l.b16 %v333
        %v510 = vunpack.c.l.b16 %v334
        %v511 = vunpack.c.l.b16 %v335
        %v512 = vunpack.c.l.b16 %v336
        %v513 = vpack.c.b16 %v482, %v481
        %v514 = vpack.c.b16 %v484, %v483
        %v515 = vpack.c.b16 %v486, %v485
        %v516 = vpack.c.b16 %v488, %v487
        %v517 = vpack.c.b16 %v490, %v489
        %v518 = vpack.c.b16 %v492, %v491
        %v519 = vpack.c.b16 %v494, %v493
        %v520 = vpack.c.b16 %v496, %v495
        %v521 = vpack.c.b16 %v498, %v497
        %v522 = vpack.c.b16 %v500, %v499
        %v523 = vpack.c.b16 %v502, %v501
        %v524 = vpack.c.b16 %v504, %v503
        %v525 = vpack.c.b16 %v506, %v505
        %v526 = vpack.c.b16 %v508, %v507
        %v527 = vpack.c.b16 %v510, %v509
        %v528 = vpack.c.b16 %v512, %v511
        %545 = vmatprep.subr.bf16.mxu0 0
        %546 = vmatpush1.bf16.msra.mxu0 %v520
        %547 = vmatprep.subr.bf16.mxu0 0
        %548 = vmatpush1.bf16.msra.mxu0 %v519
        %549 = vmatprep.subr.bf16.mxu0 0
        %550 = vmatpush1.bf16.msra.mxu0 %v518
        %551 = vmatprep.subr.bf16.mxu0 0
        %552 = vmatpush1.bf16.msra.mxu0 %v517
        %553 = vmatprep.subr.bf16.mxu0 0
        %554 = vmatpush1.bf16.msra.mxu0 %v516
        %555 = vmatprep.subr.bf16.mxu0 0
        %556 = vmatpush1.bf16.msra.mxu0 %v515
        %557 = vmatprep.subr.bf16.mxu0 0
        %558 = vmatpush1.bf16.msra.mxu0 %v514
        %559 = vmatprep.subr.bf16.mxu0 0
        %560 = vmatpush1.bf16.msra.mxu0 %v513
        %561 = vmatprep.subr.bf16.mxu0 0
        %562 = vmatpush2.bf16.msra.mxu0 %v528
        %563 = vmatprep.subr.bf16.mxu0 0
        %564 = vmatpush2.bf16.msra.mxu0 %v527
        %565 = vmatprep.subr.bf16.mxu0 0
        %566 = vmatpush2.bf16.msra.mxu0 %v526
        %567 = vmatprep.subr.bf16.mxu0 0
        %568 = vmatpush2.bf16.msra.mxu0 %v525
        %569 = vmatprep.subr.bf16.mxu0 0
        %570 = vmatpush2.bf16.msra.mxu0 %v524
        %571 = vmatprep.subr.bf16.mxu0 0
        %572 = vmatpush2.bf16.msra.mxu0 %v523
        %573 = vmatprep.subr.bf16.mxu0 0
        %574 = vmatpush2.bf16.msra.mxu0 %v522
        %575 = vmatprep.subr.bf16.mxu0 0
        %576 = vmatpush2.bf16.msra.mxu0 %v521
        %577 = vmatprep.mubr.bf16.mxu0 %v418
        %578 = vmatmul.mubr.bf16.gmra.mxu0 %v417
        %v579 = vpop.f32.mrf.mxu0
        %v580 = vadd.f32 0.0, %v579
        %v581 = vpop.f32.mrf.mxu0
        %v582 = vpop.f32.mrf.mxu0
        %v583 = vadd.f32 0.0, %v582
        %v584 = vpop.f32.mrf.mxu0
        %585 = vmatprep.mubr.bf16.mxu0 %v420
        %586 = vmatmul.mubr.bf16.gmra.mxu0 %v419
        %v587 = vpop.f32.mrf.mxu0
        %v588 = vadd.f32 0.0, %v587
        %v589 = vpop.f32.mrf.mxu0
        %v590 = vpop.f32.mrf.mxu0
        %v591 = vadd.f32 0.0, %v590
        %v592 = vpop.f32.mrf.mxu0
        %593 = vmatprep.mubr.bf16.mxu0 %v422
        %594 = vmatmul.mubr.bf16.gmra.mxu0 %v421
        %v595 = vpop.f32.mrf.mxu0
        %v596 = vadd.f32 0.0, %v595
        %v597 = vpop.f32.mrf.mxu0
        %v598 = vpop.f32.mrf.mxu0
        %v599 = vadd.f32 0.0, %v598
        %v600 = vpop.f32.mrf.mxu0
        %601 = vmatprep.mubr.bf16.mxu0 %v424
        %602 = vmatmul.mubr.bf16.gmra.mxu0 %v423
        %v603 = vpop.f32.mrf.mxu0
        %v604 = vadd.f32 0.0, %v603
        %v605 = vpop.f32.mrf.mxu0
        %v606 = vpop.f32.mrf.mxu0
        %v607 = vadd.f32 0.0, %v606
        %v608 = vpop.f32.mrf.mxu0
        %609 = vmatprep.mubr.bf16.mxu0 %v426
        %610 = vmatmul.mubr.bf16.gmra.mxu0 %v425
        %v611 = vpop.f32.mrf.mxu0
        %v612 = vadd.f32 0.0, %v611
        %v613 = vpop.f32.mrf.mxu0
        %v614 = vpop.f32.mrf.mxu0
        %v615 = vadd.f32 0.0, %v614
        %v616 = vpop.f32.mrf.mxu0
        %617 = vmatprep.mubr.bf16.mxu0 %v428
        %618 = vmatmul.mubr.bf16.gmra.mxu0 %v427
        %v619 = vpop.f32.mrf.mxu0
        %v620 = vadd.f32 0.0, %v619
        %v621 = vpop.f32.mrf.mxu0
        %v622 = vpop.f32.mrf.mxu0
        %v623 = vadd.f32 0.0, %v622
        %v624 = vpop.f32.mrf.mxu0
        %625 = vmatprep.mubr.bf16.mxu0 %v430
        %626 = vmatmul.mubr.bf16.gmra.mxu0 %v429
        %v627 = vpop.f32.mrf.mxu0
        %v628 = vadd.f32 0.0, %v627
        %v629 = vpop.f32.mrf.mxu0
        %v630 = vpop.f32.mrf.mxu0
        %v631 = vadd.f32 0.0, %v630
        %v632 = vpop.f32.mrf.mxu0
        %633 = vmatprep.mubr.bf16.mxu0 %v432
        %634 = vmatmul.mubr.bf16.gmra.mxu0 %v431
        %v635 = vpop.f32.mrf.mxu0
        %v636 = vadd.f32 0.0, %v635
        %v637 = vpop.f32.mrf.mxu0
        %v638 = vpop.f32.mrf.mxu0
        %v639 = vadd.f32 0.0, %v638
        %v640 = vpop.f32.mrf.mxu0
        %641 = vdwg.mxu0
        %v642 = vadd.f32 %v337, %v580
        %v643 = vadd.f32 %v338, %v583
        %v644 = vadd.f32 %v339, %v588
        %v645 = vadd.f32 %v340, %v591
        %v646 = vadd.f32 %v341, %v596
        %v647 = vadd.f32 %v342, %v599
        %v648 = vadd.f32 %v343, %v604
        %v649 = vadd.f32 %v344, %v607
        %v650 = vadd.f32 %v345, %v612
        %v651 = vadd.f32 %v346, %v615
        %v652 = vadd.f32 %v347, %v620
        %v653 = vadd.f32 %v348, %v623
        %v654 = vadd.f32 %v349, %v628
        %v655 = vadd.f32 %v350, %v631
        %v656 = vadd.f32 %v351, %v636
        %v657 = vadd.f32 %v352, %v639
        %658 = vst [vmem:[#allocation2] sm:$0xff] %v642
        %659 = vst [vmem:[#allocation2 + $0x8] sm:$0xff] %v643
        %660 = vst [vmem:[#allocation2 + $0x10] sm:$0xff] %v644
        %661 = vst [vmem:[#allocation2 + $0x18] sm:$0xff] %v645
        %662 = vst [vmem:[#allocation2 + $0x20] sm:$0xff] %v646
        %663 = vst [vmem:[#allocation2 + $0x28] sm:$0xff] %v647
        %664 = vst [vmem:[#allocation2 + $0x30] sm:$0xff] %v648
        %665 = vst [vmem:[#allocation2 + $0x38] sm:$0xff] %v649
        %666 = vst [vmem:[#allocation2 + $0x40] sm:$0xff] %v650
        %667 = vst [vmem:[#allocation2 + $0x48] sm:$0xff] %v651
        %668 = vst [vmem:[#allocation2 + $0x50] sm:$0xff] %v652
        %669 = vst [vmem:[#allocation2 + $0x58] sm:$0xff] %v653
        %670 = vst [vmem:[#allocation2 + $0x60] sm:$0xff] %v654
        %671 = vst [vmem:[#allocation2 + $0x68] sm:$0xff] %v655
        %672 = vst [vmem:[#allocation2 + $0x70] sm:$0xff] %v656
        %673 = vst [vmem:[#allocation2 + $0x78] sm:$0xff] %v657
        // Predicated region
        $region45: #{_forward.2} parent=35 // pred_check
          %p674 = pneg %p280
        $region46: #{_forward.2} parent=35 // pred_check_branch
          %676 = sbr.rel (%p674) target = $region48
        $region47: #{_forward.2} parent=35 // pred_region
          %v677 = vld [vmem:[#allocation2] sm:$0xff]
          %v678 = vld [vmem:[#allocation2 + $0x8] sm:$0xff]
          %v679 = vld [vmem:[#allocation2 + $0x10] sm:$0xff]
          %v680 = vld [vmem:[#allocation2 + $0x18] sm:$0xff]
          %v681 = vld [vmem:[#allocation2 + $0x20] sm:$0xff]
          %v682 = vld [vmem:[#allocation2 + $0x28] sm:$0xff]
          %v683 = vld [vmem:[#allocation2 + $0x30] sm:$0xff]
          %v684 = vld [vmem:[#allocation2 + $0x38] sm:$0xff]
          %v685 = vld [vmem:[#allocation2 + $0x40] sm:$0xff]
          %v686 = vld [vmem:[#allocation2 + $0x48] sm:$0xff]
          %v687 = vld [vmem:[#allocation2 + $0x50] sm:$0xff]
          %v688 = vld [vmem:[#allocation2 + $0x58] sm:$0xff]
          %v689 = vld [vmem:[#allocation2 + $0x60] sm:$0xff]
          %v690 = vld [vmem:[#allocation2 + $0x68] sm:$0xff]
          %v691 = vld [vmem:[#allocation2 + $0x70] sm:$0xff]
          %v692 = vld [vmem:[#allocation2 + $0x78] sm:$0xff]
          %v693 = vld [vmem:[%s2] sm:$0x1]
          %v695 = vlaneseq
          %v696 = vshrl.u32 %v695, 7
          %v697 = vsub.s32 0, %v696
          %v698 = vrot.slane %v693, %v697
          %v700 = vadd.f32 %v677, %v698
          %v701 = vadd.f32 %v678, %v698
          %v702 = vadd.f32 %v679, %v698
          %v703 = vadd.f32 %v680, %v698
          %v704 = vadd.f32 %v681, %v698
          %v705 = vadd.f32 %v682, %v698
          %v706 = vadd.f32 %v683, %v698
          %v707 = vadd.f32 %v684, %v698
          %v708 = vadd.f32 %v685, %v698
          %v709 = vadd.f32 %v686, %v698
          %v710 = vadd.f32 %v687, %v698
          %v711 = vadd.f32 %v688, %v698
          %v712 = vadd.f32 %v689, %v698
          %v713 = vadd.f32 %v690, %v698
          %v714 = vadd.f32 %v691, %v698
          %v715 = vadd.f32 %v692, %v698
          %v716 = vmax.f32 %v700, 0.0
          %v717 = vmax.f32 %v701, 0.0
          %v718 = vmax.f32 %v702, 0.0
          %v719 = vmax.f32 %v703, 0.0
          %v720 = vmax.f32 %v704, 0.0
          %v721 = vmax.f32 %v705, 0.0
          %v722 = vmax.f32 %v706, 0.0
          %v723 = vmax.f32 %v707, 0.0
          %v724 = vmax.f32 %v708, 0.0
          %v725 = vmax.f32 %v709, 0.0
          %v726 = vmax.f32 %v710, 0.0
          %v727 = vmax.f32 %v711, 0.0
          %v728 = vmax.f32 %v712, 0.0
          %v729 = vmax.f32 %v713, 0.0
          %v730 = vmax.f32 %v714, 0.0
          %v731 = vmax.f32 %v715, 0.0
          %732 = vst [vmem:[%s271] sm:$0xff] %v716
          %733 = vst [vmem:[%s271 + $0x8] sm:$0xff] %v717
          %734 = vst [vmem:[%s271 + $0x10] sm:$0xff] %v718
          %735 = vst [vmem:[%s271 + $0x18] sm:$0xff] %v719
          %736 = vst [vmem:[%s271 + $0x20] sm:$0xff] %v720
          %737 = vst [vmem:[%s271 + $0x28] sm:$0xff] %v721
          %738 = vst [vmem:[%s271 + $0x30] sm:$0xff] %v722
          %739 = vst [vmem:[%s271 + $0x38] sm:$0xff] %v723
          %740 = vst [vmem:[%s271 + $0x40] sm:$0xff] %v724
          %741 = vst [vmem:[%s271 + $0x48] sm:$0xff] %v725
          %742 = vst [vmem:[%s271 + $0x50] sm:$0xff] %v726
          %743 = vst [vmem:[%s271 + $0x58] sm:$0xff] %v727
          %744 = vst [vmem:[%s271 + $0x60] sm:$0xff] %v728
          %745 = vst [vmem:[%s271 + $0x68] sm:$0xff] %v729
          %746 = vst [vmem:[%s271 + $0x70] sm:$0xff] %v730
          %747 = vst [vmem:[%s271 + $0x78] sm:$0xff] %v731
          %v748 = vpack.c.bf16 %v717, %v716
          %v749 = vpack.c.bf16 %v719, %v718
          %v750 = vpack.c.bf16 %v721, %v720
          %v751 = vpack.c.bf16 %v723, %v722
          %v752 = vpack.c.bf16 %v725, %v724
          %v753 = vpack.c.bf16 %v727, %v726
          %v754 = vpack.c.bf16 %v729, %v728
          %v755 = vpack.c.bf16 %v731, %v730
          %v756 = vld [vmem:[%s3] sm:$0xf]
          %v757 = vld [vmem:[%s3 + $0x4] sm:$0xf]
          %v758 = vld [vmem:[%s3 + $0x8] sm:$0xf]
          %v759 = vld [vmem:[%s3 + $0xc] sm:$0xf]
          %v760 = vld [vmem:[%s3 + $0x10] sm:$0xf]
          %v761 = vld [vmem:[%s3 + $0x14] sm:$0xf]
          %v762 = vld [vmem:[%s3 + $0x18] sm:$0xf]
          %v763 = vld [vmem:[%s3 + $0x1c] sm:$0xf]
          %v764 = vld [vmem:[%s3 + $0x20] sm:$0xf]
          %v765 = vld [vmem:[%s3 + $0x24] sm:$0xf]
          %v766 = vld [vmem:[%s3 + $0x28] sm:$0xf]
          %v767 = vld [vmem:[%s3 + $0x2c] sm:$0xf]
          %v768 = vld [vmem:[%s3 + $0x30] sm:$0xf]
          %v769 = vld [vmem:[%s3 + $0x34] sm:$0xf]
          %v770 = vld [vmem:[%s3 + $0x38] sm:$0xf]
          %v771 = vld [vmem:[%s3 + $0x3c] sm:$0xf]
          %v788 = vunpack.c.l.b16 %v756
          %v789 = vunpack.c.l.b16 %v757
          %v790 = vunpack.c.l.b16 %v758
          %v791 = vunpack.c.l.b16 %v759
          %v792 = vunpack.c.l.b16 %v760
          %v793 = vunpack.c.l.b16 %v761
          %v794 = vunpack.c.l.b16 %v762
          %v795 = vunpack.c.l.b16 %v763
          %v796 = vunpack.c.l.b16 %v764
          %v797 = vunpack.c.l.b16 %v765
          %v798 = vunpack.c.l.b16 %v766
          %v799 = vunpack.c.l.b16 %v767
          %v800 = vunpack.c.l.b16 %v768
          %v801 = vunpack.c.l.b16 %v769
          %v802 = vunpack.c.l.b16 %v770
          %v803 = vunpack.c.l.b16 %v771
          %v804 = vpack.c.b16 %v789, %v788
          %v805 = vpack.c.b16 %v791, %v790
          %v806 = vpack.c.b16 %v793, %v792
          %v807 = vpack.c.b16 %v795, %v794
          %v808 = vpack.c.b16 %v797, %v796
          %v809 = vpack.c.b16 %v799, %v798
          %v810 = vpack.c.b16 %v801, %v800
          %v811 = vpack.c.b16 %v803, %v802
          %820 = vmatprep.subr.bf16.mxu0 0
          %821 = vmatpush1.bf16.msra.mxu0 %v811
          %822 = vmatprep.subr.bf16.mxu0 0
          %823 = vmatpush1.bf16.msra.mxu0 %v810
          %824 = vmatprep.subr.bf16.mxu0 0
          %825 = vmatpush1.bf16.msra.mxu0 %v809
          %826 = vmatprep.subr.bf16.mxu0 0
          %827 = vmatpush1.bf16.msra.mxu0 %v808
          %828 = vmatprep.subr.bf16.mxu0 0
          %829 = vmatpush1.bf16.msra.mxu0 %v807
          %830 = vmatprep.subr.bf16.mxu0 0
          %831 = vmatpush1.bf16.msra.mxu0 %v806
          %832 = vmatprep.subr.bf16.mxu0 0
          %833 = vmatpush1.bf16.msra.mxu0 %v805
          %834 = vmatprep.subr.bf16.mxu0 0
          %835 = vmatpush1.bf16.msra.mxu0 %v804
          %836 = vmatprep.subr.bf16.mxu0 0
          %837 = vmatpush2.bf16.msra.mxu0 0
          %838 = vmatprep.subr.bf16.mxu0 0
          %839 = vmatpush2.bf16.msra.mxu0 0
          %840 = vmatprep.subr.bf16.mxu0 0
          %841 = vmatpush2.bf16.msra.mxu0 0
          %842 = vmatprep.subr.bf16.mxu0 0
          %843 = vmatpush2.bf16.msra.mxu0 0
          %844 = vmatprep.subr.bf16.mxu0 0
          %845 = vmatpush2.bf16.msra.mxu0 0
          %846 = vmatprep.subr.bf16.mxu0 0
          %847 = vmatpush2.bf16.msra.mxu0 0
          %848 = vmatprep.subr.bf16.mxu0 0
          %849 = vmatpush2.bf16.msra.mxu0 0
          %850 = vmatprep.subr.bf16.mxu0 0
          %851 = vmatpush2.bf16.msra.mxu0 0
          %852 = vmatprep.mubr.bf16.mxu0 0
          %853 = vmatmul.mubr.bf16.gmra.mxu0 %v748
          %v854 = vpop.f32.mrf.mxu0
          %v855 = vadd.f32 0.0, %v854
          %v856 = vpop.f32.mrf.mxu0
          %v857 = vpop.f32.mrf.mxu0
          %v858 = vadd.f32 0.0, %v857
          %v859 = vpop.f32.mrf.mxu0
          %860 = vmatprep.mubr.bf16.mxu0 0
          %861 = vmatmul.mubr.bf16.gmra.mxu0 %v749
          %v862 = vpop.f32.mrf.mxu0
          %v863 = vadd.f32 0.0, %v862
          %v864 = vpop.f32.mrf.mxu0
          %v865 = vpop.f32.mrf.mxu0
          %v866 = vadd.f32 0.0, %v865
          %v867 = vpop.f32.mrf.mxu0
          %868 = vmatprep.mubr.bf16.mxu0 0
          %869 = vmatmul.mubr.bf16.gmra.mxu0 %v750
          %v870 = vpop.f32.mrf.mxu0
          %v871 = vadd.f32 0.0, %v870
          %v872 = vpop.f32.mrf.mxu0
          %v873 = vpop.f32.mrf.mxu0
          %v874 = vadd.f32 0.0, %v873
          %v875 = vpop.f32.mrf.mxu0
          %876 = vmatprep.mubr.bf16.mxu0 0
          %877 = vmatmul.mubr.bf16.gmra.mxu0 %v751
          %v878 = vpop.f32.mrf.mxu0
          %v879 = vadd.f32 0.0, %v878
          %v880 = vpop.f32.mrf.mxu0
          %v881 = vpop.f32.mrf.mxu0
          %v882 = vadd.f32 0.0, %v881
          %v883 = vpop.f32.mrf.mxu0
          %884 = vmatprep.mubr.bf16.mxu0 0
          %885 = vmatmul.mubr.bf16.gmra.mxu0 %v752
          %v886 = vpop.f32.mrf.mxu0
          %v887 = vadd.f32 0.0, %v886
          %v888 = vpop.f32.mrf.mxu0
          %v889 = vpop.f32.mrf.mxu0
          %v890 = vadd.f32 0.0, %v889
          %v891 = vpop.f32.mrf.mxu0
          %892 = vmatprep.mubr.bf16.mxu0 0
          %893 = vmatmul.mubr.bf16.gmra.mxu0 %v753
          %v894 = vpop.f32.mrf.mxu0
          %v895 = vadd.f32 0.0, %v894
          %v896 = vpop.f32.mrf.mxu0
          %v897 = vpop.f32.mrf.mxu0
          %v898 = vadd.f32 0.0, %v897
          %v899 = vpop.f32.mrf.mxu0
          %900 = vmatprep.mubr.bf16.mxu0 0
          %901 = vmatmul.mubr.bf16.gmra.mxu0 %v754
          %v902 = vpop.f32.mrf.mxu0
          %v903 = vadd.f32 0.0, %v902
          %v904 = vpop.f32.mrf.mxu0
          %v905 = vpop.f32.mrf.mxu0
          %v906 = vadd.f32 0.0, %v905
          %v907 = vpop.f32.mrf.mxu0
          %908 = vmatprep.mubr.bf16.mxu0 0
          %909 = vmatmul.mubr.bf16.gmra.mxu0 %v755
          %v910 = vpop.f32.mrf.mxu0
          %v911 = vadd.f32 0.0, %v910
          %v912 = vpop.f32.mrf.mxu0
          %v913 = vpop.f32.mrf.mxu0
          %v914 = vadd.f32 0.0, %v913
          %v915 = vpop.f32.mrf.mxu0
          %916 = vdwg.mxu0
          %v917 = vpack.c.bf16 %v858, %v855
          %v918 = vpack.c.bf16 %v866, %v863
          %v919 = vpack.c.bf16 %v874, %v871
          %v920 = vpack.c.bf16 %v882, %v879
          %v921 = vpack.c.bf16 %v890, %v887
          %v922 = vpack.c.bf16 %v898, %v895
          %v923 = vpack.c.bf16 %v906, %v903
          %v924 = vpack.c.bf16 %v914, %v911
          %v933 = vunpack.c.l.b16 %v917
          %v934 = vunpack.c.h.b16 %v917
          %v935 = vunpack.c.l.b16 %v918
          %v936 = vunpack.c.h.b16 %v918
          %v937 = vunpack.c.l.b16 %v919
          %v938 = vunpack.c.h.b16 %v919
          %v939 = vunpack.c.l.b16 %v920
          %v940 = vunpack.c.h.b16 %v920
          %v941 = vunpack.c.l.b16 %v921
          %v942 = vunpack.c.h.b16 %v921
          %v943 = vunpack.c.l.b16 %v922
          %v944 = vunpack.c.h.b16 %v922
          %v945 = vunpack.c.l.b16 %v923
          %v946 = vunpack.c.h.b16 %v923
          %v947 = vunpack.c.l.b16 %v924
          %v948 = vunpack.c.h.b16 %v924
          %v949 = vpack.c.b16 %v933, %v933
          %v950 = vpack.c.b16 %v934, %v934
          %v951 = vpack.c.b16 %v935, %v935
          %v952 = vpack.c.b16 %v936, %v936
          %v953 = vpack.c.b16 %v937, %v937
          %v954 = vpack.c.b16 %v938, %v938
          %v955 = vpack.c.b16 %v939, %v939
          %v956 = vpack.c.b16 %v940, %v940
          %v957 = vpack.c.b16 %v941, %v941
          %v958 = vpack.c.b16 %v942, %v942
          %v959 = vpack.c.b16 %v943, %v943
          %v960 = vpack.c.b16 %v944, %v944
          %v961 = vpack.c.b16 %v945, %v945
          %v962 = vpack.c.b16 %v946, %v946
          %v963 = vpack.c.b16 %v947, %v947
          %v964 = vpack.c.b16 %v948, %v948
          %981 = vst [vmem:[%s277] sm:$0xf] %v949
          %982 = vst [vmem:[%s277 + $0x4] sm:$0xf] %v950
          %983 = vst [vmem:[%s277 + $0x8] sm:$0xf] %v951
          %984 = vst [vmem:[%s277 + $0xc] sm:$0xf] %v952
          %985 = vst [vmem:[%s277 + $0x10] sm:$0xf] %v953
          %986 = vst [vmem:[%s277 + $0x14] sm:$0xf] %v954
          %987 = vst [vmem:[%s277 + $0x18] sm:$0xf] %v955
          %988 = vst [vmem:[%s277 + $0x1c] sm:$0xf] %v956
          %989 = vst [vmem:[%s277 + $0x20] sm:$0xf] %v957
          %990 = vst [vmem:[%s277 + $0x24] sm:$0xf] %v958
          %991 = vst [vmem:[%s277 + $0x28] sm:$0xf] %v959
          %992 = vst [vmem:[%s277 + $0x2c] sm:$0xf] %v960
          %993 = vst [vmem:[%s277 + $0x30] sm:$0xf] %v961
          %994 = vst [vmem:[%s277 + $0x34] sm:$0xf] %v962
          %995 = vst [vmem:[%s277 + $0x38] sm:$0xf] %v963
          %996 = vst [vmem:[%s277 + $0x3c] sm:$0xf] %v964
        $region48: #{_forward.2} parent=35 // pred_fallthru
          _
        %s997 = smul.u32 16, %s24
        %p998 = scmp.lt.s32.totalorder %s997, 31
        %s999 = scalar_select %p998, %s997, 31
        %s1000 = smul.addr %s999, 8
        %s1001 = scalar_lea.vmem %s4, %s1000
        %s1002 = smul.u32 16, %s24
        %p1003 = scmp.lt.s32.totalorder %s1002, 31
        %s1004 = scalar_select %p1003, %s1002, 31
        %s1005 = smul.addr %s1004, 4
        %s1006 = scalar_lea.vmem %s5, %s1005
        // Predicated region
        $region49: #{_forward.2} parent=35 // pred_check
          %p1007 = pneg %p141
        $region50: #{_forward.2} parent=35 // pred_check_branch
          %1009 = sbr.rel (%p1007) target = $region52
        $region51: #{_forward.2} parent=35 // pred_region
          %s1010 = smul.u32 16, %s24
        $region52: #{_forward.2} parent=35 // pred_fallthru
          _
        // Predicated region
        $region53: #{_forward.2} parent=35 // pred_check
          %p1011 = pneg %p167
        $region54: #{_forward.2} parent=35 // pred_check_branch
          %1013 = sbr.rel (%p1011) target = $region56
        $region55: #{_forward.2} parent=35 // pred_region
          %s1014 = smul.u32 16, %s24
        $region56: #{_forward.2} parent=35 // pred_fallthru
          _
      $region36: #{_forward.2} parent=5 // pred_fallthru
        _
      %p1015 = scmp.le.s32.totalorder 2, %s15
      // Predicated region
      $region57: #{_forward.2} parent=5 // pred_check
        %p1016 = pneg %p1015
      $region58: #{_forward.2} parent=5 // pred_check_branch
        %1018 = sbr.rel (%p1016) target = $region60
      $region59: #{_forward.2} parent=5 // pred_region
        %s1019 = ssub.s32 %s15, 2
        // Predicated region
        $region61: #{_forward.2} parent=59 // pred_check
          %p1020 = pneg %p147
        $region62: #{_forward.2} parent=59 // pred_check_branch
          %1022 = sbr.rel (%p1020) target = $region64
        $region63: #{_forward.2} parent=59 // pred_region
          %s1023 = smul.u32 16, %s26
          %p1024 = scmp.lt.s32.totalorder %s1023, 31
          %s1025 = scalar_select %p1024, %s1023, 31
          %s1026 = smul.addr %s1025, 8
          %s1027 = scalar_lea.vmem %s4, %s1026
        $region64: #{_forward.2} parent=59 // pred_fallthru
          _
        // Predicated region
        $region65: #{_forward.2} parent=59 // pred_check
          %p1028 = pneg %p173
        $region66: #{_forward.2} parent=59 // pred_check_branch
          %1030 = sbr.rel (%p1028) target = $region68
        $region67: #{_forward.2} parent=59 // pred_region
          %s1031 = smul.u32 16, %s26
          %p1032 = scmp.lt.s32.totalorder %s1031, 31
          %s1033 = scalar_select %p1032, %s1031, 31
          %s1034 = smul.addr %s1033, 4
          %s1035 = scalar_lea.vmem %s5, %s1034
        $region68: #{_forward.2} parent=59 // pred_fallthru
          _
      $region60: #{_forward.2} parent=5 // pred_fallthru
        _
    $region6: #{_forward.2} parent=1 // loop_footer
      %s19 = sadd.s32 1, %s15
    $region7: #{_forward.2} parent=1 // loop_footer_branch
      %14 = sbr.rel target = $region3
    $region8: #{_forward.2} parent=1 // loop_exit
      _
    %1036 = vsyncpa [#allocation4], 1
    %s1037 = scalar_lea.sflag [#allocation4], 1
    %1038 = vsyncpa %s1037, 1

// kernel: _forward.3
$region0: #{_forward.3}
  #allocation0 [shape = 'u32[]', space=smem, size = 0x4, offset = 0x4, fixed_abs, tag = 'smem constant byte address 0x4 - core index']
  #allocation1 [shape = 'u32[144,128]{1,0:T(1,128)}', space=vmem, size = 0x12000, scoped, tag = 'internal scratch']
  #allocation2 [shape = 'f32[128,128]{1,0:T(8,128)}', space=vmem, size = 0x10000, scoped, tag = 'scratch operand']
  %s0 = inlined_call_operand.vmem [shape: bf16[256,256], index: 0, kind: input, shape index: {}]
  %s1 = inlined_call_operand.vmem [shape: bf16[256,128], index: 1, kind: input, shape index: {}]
  %s2 = inlined_call_operand.vmem [shape: f32[1,128], index: 2, kind: input, shape index: {}]
  %s3 = inlined_call_operand.vmem [shape: bf16[128,128], index: 3, kind: input, shape index: {}]
  %s4 = inlined_call_operand.vmem [shape: f32[1,128], index: 4, kind: input, shape index: {}]
  %s5 = inlined_call_operand.vmem [shape: f32[256,128], index: 5, kind: output, shape index: {}]
  %s6 = sld [smem:[#allocation0]]
  $region61: #{_forward.3} parent=0
    _
  %s8 = ssub.s32 1, %s6
  %s9 = scalar_select 0, %s8, %s6
  loop: start=0, step=1, limit=4
  $region2: #{_forward.3} parent=0 // loop_pre_header
    _
  $region3: #{_forward.3} parent=0 // loop_header
    %s11 = sphi 0, %s15
    %p12 = scmp.ge.s32.totalorder %s11, 4
    %s18 = sphi 0, %s30
    %s19 = sphi 0, %s26
    %s20 = sphi 0, %s18
    %s21 = sphi 0, %s19
    %s22 = sphi 0, %s20
    %s23 = sphi 0, %s21
    %s35 = sphi 0, %s37
    %s38 = sphi 0, %s35
    %s39 = sphi 0, %s38
    %s55 = sphi 0, %s39
    %s59 = sphi 0, %s59
    %s61 = sphi 0, %s59
    %s62 = sphi 0, %s61
    %s76 = sphi 0, %s62
    %s80 = sphi 0, %s80
    %s82 = sphi 0, %s80
    %s83 = sphi 0, %s82
    %s97 = sphi 0, %s83
    %s101 = sphi 0, %s101
    %s103 = sphi 0, %s101
    %s104 = sphi 0, %s103
    %s118 = sphi 0, %s104
    %s122 = sphi 0, %s122
    %s124 = sphi 0, %s122
    %s125 = sphi 0, %s124
    %s139 = sphi 0, %s125
    %s145 = sphi 0, %s147
    %s148 = sphi 0, %s145
    %s149 = sphi 0, %s148
    %s165 = sphi 0, %s149
  $region4: #{_forward.3} parent=0 // loop_header_branch
    %14 = sbr.rel (%p12) target = $region8
  $region5: #{_forward.3} parent=0 // loop_body
    %s16 = ssub.s32 %s11, 1
    %s17 = ssub.s32 %s11, 2
    %s24 = sadd.s32 1, %s19
    %p25 = scmp.ge.s32.totalorder %s24, 1
    %s26 = scalar_select %p25, 0, %s24
    %s27 = sadd.s32 1, %s18
    %s28 = scalar_select %p25, %s27, %s18
    %p29 = scmp.ge.s32.totalorder %s28, 2
    %s30 = scalar_select %p29, 0, %s28
    %s31 = ssub.s32 %s18, %s30
    %s32 = ssub.s32 %s19, %s26
    %s33 = sor.u32 %s31, %s32
    %p34 = scmp.eq.s32.totalorder %s33, 0
    %s36 = sadd.s32 %s35, 1
    %s37 = scalar_select %p34, %s35, %s36
    %p40 = pneg %p34
    %p41 = scmp.eq.s32.totalorder %s11, 1
    %p42 = por %p40, %p41
    %p43 = scmp.ne.s32.totalorder %s35, %s38
    %p44 = scmp.eq.s32.totalorder %s11, 0
    %p45 = por %p43, %p44
    %p46 = scmp.ne.s32.totalorder %s35, %s38
    %p47 = scmp.eq.s32.totalorder %s16, 1
    %p48 = por %p46, %p47
    %p49 = scmp.ne.s32.totalorder %s38, %s39
    %p50 = scmp.eq.s32.totalorder %s16, 0
    %p51 = por %p49, %p50
    %p52 = scmp.ne.s32.totalorder %s38, %s39
    %p53 = scmp.eq.s32.totalorder %s17, 1
    %p54 = por %p52, %p53
    %p56 = scmp.ne.s32.totalorder %s39, %s55
    %p57 = scmp.eq.s32.totalorder %s17, 0
    %p58 = por %p56, %p57
    %s60 = sadd.s32 %s59, 1
    %p63 = scmp.eq.s32.totalorder %s11, 1
    %p64 = scmp.ne.s32.totalorder %s59, %s61
    %p65 = scmp.eq.s32.totalorder %s11, 0
    %p66 = por %p64, %p65
    %p67 = scmp.ne.s32.totalorder %s59, %s61
    %p68 = scmp.eq.s32.totalorder %s16, 1
    %p69 = por %p67, %p68
    %p70 = scmp.ne.s32.totalorder %s61, %s62
    %p71 = scmp.eq.s32.totalorder %s16, 0
    %p72 = por %p70, %p71
    %p73 = scmp.ne.s32.totalorder %s61, %s62
    %p74 = scmp.eq.s32.totalorder %s17, 1
    %p75 = por %p73, %p74
    %p77 = scmp.ne.s32.totalorder %s62, %s76
    %p78 = scmp.eq.s32.totalorder %s17, 0
    %p79 = por %p77, %p78
    %s81 = sadd.s32 %s80, 1
    %p84 = scmp.eq.s32.totalorder %s11, 1
    %p85 = scmp.ne.s32.totalorder %s80, %s82
    %p86 = scmp.eq.s32.totalorder %s11, 0
    %p87 = por %p85, %p86
    %p88 = scmp.ne.s32.totalorder %s80, %s82
    %p89 = scmp.eq.s32.totalorder %s16, 1
    %p90 = por %p88, %p89
    %p91 = scmp.ne.s32.totalorder %s82, %s83
    %p92 = scmp.eq.s32.totalorder %s16, 0
    %p93 = por %p91, %p92
    %p94 = scmp.ne.s32.totalorder %s82, %s83
    %p95 = scmp.eq.s32.totalorder %s17, 1
    %p96 = por %p94, %p95
    %p98 = scmp.ne.s32.totalorder %s83, %s97
    %p99 = scmp.eq.s32.totalorder %s17, 0
    %p100 = por %p98, %p99
    %s102 = sadd.s32 %s101, 1
    %p105 = scmp.eq.s32.totalorder %s11, 1
    %p106 = scmp.ne.s32.totalorder %s101, %s103
    %p107 = scmp.eq.s32.totalorder %s11, 0
    %p108 = por %p106, %p107
    %p109 = scmp.ne.s32.totalorder %s101, %s103
    %p110 = scmp.eq.s32.totalorder %s16, 1
    %p111 = por %p109, %p110
    %p112 = scmp.ne.s32.totalorder %s103, %s104
    %p113 = scmp.eq.s32.totalorder %s16, 0
    %p114 = por %p112, %p113
    %p115 = scmp.ne.s32.totalorder %s103, %s104
    %p116 = scmp.eq.s32.totalorder %s17, 1
    %p117 = por %p115, %p116
    %p119 = scmp.ne.s32.totalorder %s104, %s118
    %p120 = scmp.eq.s32.totalorder %s17, 0
    %p121 = por %p119, %p120
    %s123 = sadd.s32 %s122, 1
    %p126 = scmp.eq.s32.totalorder %s11, 1
    %p127 = scmp.ne.s32.totalorder %s122, %s124
    %p128 = scmp.eq.s32.totalorder %s11, 0
    %p129 = por %p127, %p128
    %p130 = scmp.ne.s32.totalorder %s122, %s124
    %p131 = scmp.eq.s32.totalorder %s16, 1
    %p132 = por %p130, %p131
    %p133 = scmp.ne.s32.totalorder %s124, %s125
    %p134 = scmp.eq.s32.totalorder %s16, 0
    %p135 = por %p133, %p134
    %p136 = scmp.ne.s32.totalorder %s124, %s125
    %p137 = scmp.eq.s32.totalorder %s17, 1
    %p138 = por %p136, %p137
    %p140 = scmp.ne.s32.totalorder %s125, %s139
    %p141 = scmp.eq.s32.totalorder %s17, 0
    %p142 = por %p140, %p141
    %s143 = ssub.s32 %s18, %s30
    %p144 = scmp.eq.s32.totalorder %s143, 0
    %s146 = sadd.s32 %s145, 1
    %s147 = scalar_select %p144, %s145, %s146
    %p150 = pneg %p144
    %p151 = scmp.eq.s32.totalorder %s11, 1
    %p152 = por %p150, %p151
    %p153 = scmp.ne.s32.totalorder %s145, %s148
    %p154 = scmp.eq.s32.totalorder %s11, 0
    %p155 = por %p153, %p154
    %p156 = scmp.ne.s32.totalorder %s145, %s148
    %p157 = scmp.eq.s32.totalorder %s16, 1
    %p158 = por %p156, %p157
    %p159 = scmp.ne.s32.totalorder %s148, %s149
    %p160 = scmp.eq.s32.totalorder %s16, 0
    %p161 = por %p159, %p160
    %p162 = scmp.ne.s32.totalorder %s148, %s149
    %p163 = scmp.eq.s32.totalorder %s17, 1
    %p164 = por %p162, %p163
    %p166 = scmp.ne.s32.totalorder %s149, %s165
    %p167 = scmp.eq.s32.totalorder %s17, 0
    %p168 = por %p166, %p167
    %p169 = scmp.le.s32.totalorder 1, %s11
    %p170 = scmp.lt.s32.totalorder %s11, 3
    %p171 = pnand %p169, %p170
    %p172 = pneg %p171
    // Predicated region
    $region9: #{_forward.3} parent=5 // pred_check
      _
    $region10: #{_forward.3} parent=5 // pred_check_branch
      %174 = sbr.rel (%p171) target = $region12
    $region11: #{_forward.3} parent=5 // pred_region
      %s175 = ssub.s32 %s11, 1
      // Predicated region
      $region13: #{_forward.3} parent=11 // pred_check
        %p176 = pneg %p72
      $region14: #{_forward.3} parent=11 // pred_check_branch
        %178 = sbr.rel (%p176) target = $region16
      $region15: #{_forward.3} parent=11 // pred_region
        _
      $region16: #{_forward.3} parent=11 // pred_fallthru
        _
      // Predicated region
      $region17: #{_forward.3} parent=11 // pred_check
        %p179 = pneg %p93
      $region18: #{_forward.3} parent=11 // pred_check_branch
        %181 = sbr.rel (%p179) target = $region20
      $region19: #{_forward.3} parent=11 // pred_region
        _
      $region20: #{_forward.3} parent=11 // pred_fallthru
        _
      // Predicated region
      $region21: #{_forward.3} parent=11 // pred_check
        %p182 = pneg %p114
      $region22: #{_forward.3} parent=11 // pred_check_branch
        %184 = sbr.rel (%p182) target = $region24
      $region23: #{_forward.3} parent=11 // pred_region
        _
      $region24: #{_forward.3} parent=11 // pred_fallthru
        _
      // Predicated region
      $region25: #{_forward.3} parent=11 // pred_check
        %p185 = pneg %p135
      $region26: #{_forward.3} parent=11 // pred_check_branch
        %187 = sbr.rel (%p185) target = $region28
      $region27: #{_forward.3} parent=11 // pred_region
        _
      $region28: #{_forward.3} parent=11 // pred_fallthru
        _
    $region12: #{_forward.3} parent=5 // pred_fallthru
      _
    %p188 = scmp.lt.s32.totalorder %s11, 2
    // Predicated region
    $region29: #{_forward.3} parent=5 // pred_check
      %p189 = pneg %p188
    $region30: #{_forward.3} parent=5 // pred_check_branch
      %191 = sbr.rel (%p189) target = $region32
    $region31: #{_forward.3} parent=5 // pred_region
      // Predicated region
      $region33: #{_forward.3} parent=31 // pred_check
        %p192 = pneg %p45
      $region34: #{_forward.3} parent=31 // pred_check_branch
        %194 = sbr.rel (%p192) target = $region36
      $region35: #{_forward.3} parent=31 // pred_region
        %s195 = smul.u32 16, %s18
        %s196 = smul.u32 2, %s19
        %p197 = scmp.lt.s32.totalorder %s195, 31
        %s198 = scalar_select %p197, %s195, 31
        %p199 = scmp.lt.s32.totalorder %s196, 1
        %s200 = scalar_select %p199, %s196, 1
        %s201 = smul.addr %s198, 2
        %s202 = sadd.s32 %s200, %s201
        %s203 = smul.addr %s202, 4
        %s204 = scalar_lea.vmem %s0, %s203
        %s205 = smul.u32 16, %s18
        %s206 = smul.u32 2, %s19
      $region36: #{_forward.3} parent=31 // pred_fallthru
        _
    $region32: #{_forward.3} parent=5 // pred_fallthru
      _
    %p207 = scmp.le.s32.totalorder 1, %s11
    %p208 = scmp.lt.s32.totalorder %s11, 3
    %p209 = pnand %p207, %p208
    %p210 = pneg %p209
    // Predicated region
    $region37: #{_forward.3} parent=5 // pred_check
      _
    $region38: #{_forward.3} parent=5 // pred_check_branch
      %212 = sbr.rel (%p209) target = $region40
    $region39: #{_forward.3} parent=5 // pred_region
      %s213 = ssub.s32 %s11, 1
      %s214 = smul.u32 16, %s20
      %s215 = smul.u32 2, %s21
      %p216 = scmp.lt.s32.totalorder %s214, 31
      %s217 = scalar_select %p216, %s214, 31
      %p218 = scmp.lt.s32.totalorder %s215, 1
      %s219 = scalar_select %p218, %s215, 1
      %s220 = smul.addr %s217, 2
      %s221 = sadd.s32 %s219, %s220
      %s222 = smul.addr %s221, 4
      %s223 = scalar_lea.vmem %s0, %s222
      %p224 = pneg %p51
      %p225 = pneg %p48
      %p226 = pneg %p72
      %p227 = pneg %p69
      %p228 = pneg %p93
      %p229 = pneg %p90
      %p230 = pneg %p114
      %p231 = pneg %p111
      %p232 = pneg %p135
      %p233 = pneg %p132
      %p234 = pneg %p161
      %p235 = pneg %p158
      %s236 = smul.u32 16, %s20
      %p237 = scmp.lt.s32.totalorder %s236, 31
      %s238 = scalar_select %p237, %s236, 31
      %s239 = smul.addr %s238, 8
      %s240 = scalar_lea.vmem %s5, %s239
      %s241 = smul.u32 16, %s20
      %s242 = smul.u32 2, %s21
      %p243 = scmp.lt.s32.totalorder %s241, 31
      %s244 = scalar_select %p243, %s241, 31
      %p245 = scmp.lt.s32.totalorder %s242, 1
      %s246 = scalar_select %p245, %s242, 1
      %s247 = smul.addr %s244, 2
      %s248 = sadd.s32 %s246, %s247
      %s249 = smul.addr %s248, 4
      %s250 = scalar_lea.vmem %s0, %s249
      %s251 = smul.u32 16, %s20
      %s252 = smul.u32 2, %s21
      %s253 = smul.u32 16, %s20
      %p254 = scmp.lt.s32.totalorder %s253, 31
      %s255 = scalar_select %p254, %s253, 31
      %s256 = smul.addr %s255, 8
      %s257 = scalar_lea.vmem %s5, %s256
      %s258 = smul.u32 16, %s20
      %p260 = scmp.eq.s32.totalorder %s21, 0
      // Predicated region
      $region41: #{_forward.3} parent=39 // pred_check
        %p261 = pneg %p260
      $region42: #{_forward.3} parent=39 // pred_check_branch
        %263 = sbr.rel (%p261) target = $region44
      $region43: #{_forward.3} parent=39 // pred_region
        %264 = vst [vmem:[#allocation2] sm:$0xff] 0.0
        %265 = vst [vmem:[#allocation2 + $0x8] sm:$0xff] 0.0
        %266 = vst [vmem:[#allocation2 + $0x10] sm:$0xff] 0.0
        %267 = vst [vmem:[#allocation2 + $0x18] sm:$0xff] 0.0
        %268 = vst [vmem:[#allocation2 + $0x20] sm:$0xff] 0.0
        %269 = vst [vmem:[#allocation2 + $0x28] sm:$0xff] 0.0
        %270 = vst [vmem:[#allocation2 + $0x30] sm:$0xff] 0.0
        %271 = vst [vmem:[#allocation2 + $0x38] sm:$0xff] 0.0
        %272 = vst [vmem:[#allocation2 + $0x40] sm:$0xff] 0.0
        %273 = vst [vmem:[#allocation2 + $0x48] sm:$0xff] 0.0
        %274 = vst [vmem:[#allocation2 + $0x50] sm:$0xff] 0.0
        %275 = vst [vmem:[#allocation2 + $0x58] sm:$0xff] 0.0
        %276 = vst [vmem:[#allocation2 + $0x60] sm:$0xff] 0.0
        %277 = vst [vmem:[#allocation2 + $0x68] sm:$0xff] 0.0
        %278 = vst [vmem:[#allocation2 + $0x70] sm:$0xff] 0.0
        %279 = vst [vmem:[#allocation2 + $0x78] sm:$0xff] 0.0
      $region44: #{_forward.3} parent=39 // pred_fallthru
        _
      %s280 = smul.u32 %s21, 256
      %s281 = sshra.s32 %s280, 3
      %s282 = sand.u32 %s280, 7
      %s283 = smul.addr %s281, 4
      %s284 = scalar_lea.vmem %s1, %s283
      %v285 = vld [vmem:[%s284] sm:$0xf]
      %v286 = vld [vmem:[%s284 + $0x4] sm:$0xf]
      %v287 = vld [vmem:[%s284 + $0x8] sm:$0xf]
      %v288 = vld [vmem:[%s284 + $0xc] sm:$0xf]
      %v289 = vld [vmem:[%s284 + $0x10] sm:$0xf]
      %v290 = vld [vmem:[%s284 + $0x14] sm:$0xf]
      %v291 = vld [vmem:[%s284 + $0x18] sm:$0xf]
      %v292 = vld [vmem:[%s284 + $0x1c] sm:$0xf]
      %v293 = vld [vmem:[%s284 + $0x20] sm:$0xf]
      %v294 = vld [vmem:[%s284 + $0x24] sm:$0xf]
      %v295 = vld [vmem:[%s284 + $0x28] sm:$0xf]
      %v296 = vld [vmem:[%s284 + $0x2c] sm:$0xf]
      %v297 = vld [vmem:[%s284 + $0x30] sm:$0xf]
      %v298 = vld [vmem:[%s284 + $0x34] sm:$0xf]
      %v299 = vld [vmem:[%s284 + $0x38] sm:$0xf]
      %v300 = vld [vmem:[%s284 + $0x3c] sm:$0xf]
      %v301 = vld [vmem:[%s284 + $0x40] sm:$0xf]
      %v302 = vld [vmem:[%s284 + $0x44] sm:$0xf]
      %v303 = vld [vmem:[%s284 + $0x48] sm:$0xf]
      %v304 = vld [vmem:[%s284 + $0x4c] sm:$0xf]
      %v305 = vld [vmem:[%s284 + $0x50] sm:$0xf]
      %v306 = vld [vmem:[%s284 + $0x54] sm:$0xf]
      %v307 = vld [vmem:[%s284 + $0x58] sm:$0xf]
      %v308 = vld [vmem:[%s284 + $0x5c] sm:$0xf]
      %v309 = vld [vmem:[%s284 + $0x60] sm:$0xf]
      %v310 = vld [vmem:[%s284 + $0x64] sm:$0xf]
      %v311 = vld [vmem:[%s284 + $0x68] sm:$0xf]
      %v312 = vld [vmem:[%s284 + $0x6c] sm:$0xf]
      %v313 = vld [vmem:[%s284 + $0x70] sm:$0xf]
      %v314 = vld [vmem:[%s284 + $0x74] sm:$0xf]
      %v315 = vld [vmem:[%s284 + $0x78] sm:$0xf]
      %v316 = vld [vmem:[%s284 + $0x7c] sm:$0xf]
      %v317 = vld [vmem:[#allocation2] sm:$0xff]
      %v318 = vld [vmem:[#allocation2 + $0x8] sm:$0xff]
      %v319 = vld [vmem:[#allocation2 + $0x10] sm:$0xff]
      %v320 = vld [vmem:[#allocation2 + $0x18] sm:$0xff]
      %v321 = vld [vmem:[#allocation2 + $0x20] sm:$0xff]
      %v322 = vld [vmem:[#allocation2 + $0x28] sm:$0xff]
      %v323 = vld [vmem:[#allocation2 + $0x30] sm:$0xff]
      %v324 = vld [vmem:[#allocation2 + $0x38] sm:$0xff]
      %v325 = vld [vmem:[#allocation2 + $0x40] sm:$0xff]
      %v326 = vld [vmem:[#allocation2 + $0x48] sm:$0xff]
      %v327 = vld [vmem:[#allocation2 + $0x50] sm:$0xff]
      %v328 = vld [vmem:[#allocation2 + $0x58] sm:$0xff]
      %v329 = vld [vmem:[#allocation2 + $0x60] sm:$0xff]
      %v330 = vld [vmem:[#allocation2 + $0x68] sm:$0xff]
      %v331 = vld [vmem:[#allocation2 + $0x70] sm:$0xff]
      %v332 = vld [vmem:[#allocation2 + $0x78] sm:$0xff]
      %v333 = vld [vmem:[%s250] sm:$0xff]
      %v334 = vld [vmem:[%s250 + $0x8] sm:$0xff]
      %v335 = vld [vmem:[%s250 + $0x10] sm:$0xff]
      %v336 = vld [vmem:[%s250 + $0x18] sm:$0xff]
      %v337 = vld [vmem:[%s250 + $0x20] sm:$0xff]
      %v338 = vld [vmem:[%s250 + $0x28] sm:$0xff]
      %v339 = vld [vmem:[%s250 + $0x30] sm:$0xff]
      %v340 = vld [vmem:[%s250 + $0x38] sm:$0xff]
      %v341 = vld [vmem:[%s250 + $0x40] sm:$0xff]
      %v342 = vld [vmem:[%s250 + $0x48] sm:$0xff]
      %v343 = vld [vmem:[%s250 + $0x50] sm:$0xff]
      %v344 = vld [vmem:[%s250 + $0x58] sm:$0xff]
      %v345 = vld [vmem:[%s250 + $0x60] sm:$0xff]
      %v346 = vld [vmem:[%s250 + $0x68] sm:$0xff]
      %v347 = vld [vmem:[%s250 + $0x70] sm:$0xff]
      %v348 = vld [vmem:[%s250 + $0x78] sm:$0xff]
      %v365 = vunpack.c.l.b16 %v333
      %v366 = vunpack.c.h.b16 %v333
      %v367 = vunpack.c.l.b16 %v334
      %v368 = vunpack.c.h.b16 %v334
      %v369 = vunpack.c.l.b16 %v335
      %v370 = vunpack.c.h.b16 %v335
      %v371 = vunpack.c.l.b16 %v336
      %v372 = vunpack.c.h.b16 %v336
      %v373 = vunpack.c.l.b16 %v337
      %v374 = vunpack.c.h.b16 %v337
      %v375 = vunpack.c.l.b16 %v338
      %v376 = vunpack.c.h.b16 %v338
      %v377 = vunpack.c.l.b16 %v339
      %v378 = vunpack.c.h.b16 %v339
      %v379 = vunpack.c.l.b16 %v340
      %v380 = vunpack.c.h.b16 %v340
      %v381 = vunpack.c.l.b16 %v341
      %v382 = vunpack.c.h.b16 %v341
      %v383 = vunpack.c.l.b16 %v342
      %v384 = vunpack.c.h.b16 %v342
      %v385 = vunpack.c.l.b16 %v343
      %v386 = vunpack.c.h.b16 %v343
      %v387 = vunpack.c.l.b16 %v344
      %v388 = vunpack.c.h.b16 %v344
      %v389 = vunpack.c.l.b16 %v345
      %v390 = vunpack.c.h.b16 %v345
      %v391 = vunpack.c.l.b16 %v346
      %v392 = vunpack.c.h.b16 %v346
      %v393 = vunpack.c.l.b16 %v347
      %v394 = vunpack.c.h.b16 %v347
      %v395 = vunpack.c.l.b16 %v348
      %v396 = vunpack.c.h.b16 %v348
      %v397 = vpack.c.b16 %v367, %v365
      %v398 = vpack.c.b16 %v368, %v366
      %v399 = vpack.c.b16 %v371, %v369
      %v400 = vpack.c.b16 %v372, %v370
      %v401 = vpack.c.b16 %v375, %v373
      %v402 = vpack.c.b16 %v376, %v374
      %v403 = vpack.c.b16 %v379, %v377
      %v404 = vpack.c.b16 %v380, %v378
      %v405 = vpack.c.b16 %v383, %v381
      %v406 = vpack.c.b16 %v384, %v382
      %v407 = vpack.c.b16 %v387, %v385
      %v408 = vpack.c.b16 %v388, %v386
      %v409 = vpack.c.b16 %v391, %v389
      %v410 = vpack.c.b16 %v392, %v390
      %v411 = vpack.c.b16 %v395, %v393
      %v412 = vpack.c.b16 %v396, %v394
      %v461 = vunpack.c.l.b16 %v285
      %v462 = vunpack.c.l.b16 %v286
      %v463 = vunpack.c.l.b16 %v287
      %v464 = vunpack.c.l.b16 %v288
      %v465 = vunpack.c.l.b16 %v289
      %v466 = vunpack.c.l.b16 %v290
      %v467 = vunpack.c.l.b16 %v291
      %v468 = vunpack.c.l.b16 %v292
      %v469 = vunpack.c.l.b16 %v293
      %v470 = vunpack.c.l.b16 %v294
      %v471 = vunpack.c.l.b16 %v295
      %v472 = vunpack.c.l.b16 %v296
      %v473 = vunpack.c.l.b16 %v297
      %v474 = vunpack.c.l.b16 %v298
      %v475 = vunpack.c.l.b16 %v299
      %v476 = vunpack.c.l.b16 %v300
      %v477 = vunpack.c.l.b16 %v301
      %v478 = vunpack.c.l.b16 %v302
      %v479 = vunpack.c.l.b16 %v303
      %v480 = vunpack.c.l.b16 %v304
      %v481 = vunpack.c.l.b16 %v305
      %v482 = vunpack.c.l.b16 %v306
      %v483 = vunpack.c.l.b16 %v307
      %v484 = vunpack.c.l.b16 %v308
      %v485 = vunpack.c.l.b16 %v309
      %v486 = vunpack.c.l.b16 %v310
      %v487 = vunpack.c.l.b16 %v311
      %v488 = vunpack.c.l.b16 %v312
      %v489 = vunpack.c.l.b16 %v313
      %v490 = vunpack.c.l.b16 %v314
      %v491 = vunpack.c.l.b16 %v315
      %v492 = vunpack.c.l.b16 %v316
      %v493 = vpack.c.b16 %v462, %v461
      %v494 = vpack.c.b16 %v464, %v463
      %v495 = vpack.c.b16 %v466, %v465
      %v496 = vpack.c.b16 %v468, %v467
      %v497 = vpack.c.b16 %v470, %v469
      %v498 = vpack.c.b16 %v472, %v471
      %v499 = vpack.c.b16 %v474, %v473
      %v500 = vpack.c.b16 %v476, %v475
      %v501 = vpack.c.b16 %v478, %v477
      %v502 = vpack.c.b16 %v480, %v479
      %v503 = vpack.c.b16 %v482, %v481
      %v504 = vpack.c.b16 %v484, %v483
      %v505 = vpack.c.b16 %v486, %v485
      %v506 = vpack.c.b16 %v488, %v487
      %v507 = vpack.c.b16 %v490, %v489
      %v508 = vpack.c.b16 %v492, %v491
      %525 = vmatprep.subr.bf16.mxu0 0
      %526 = vmatpush1.bf16.msra.mxu0 %v500
      %527 = vmatprep.subr.bf16.mxu0 0
      %528 = vmatpush1.bf16.msra.mxu0 %v499
      %529 = vmatprep.subr.bf16.mxu0 0
      %530 = vmatpush1.bf16.msra.mxu0 %v498
      %531 = vmatprep.subr.bf16.mxu0 0
      %532 = vmatpush1.bf16.msra.mxu0 %v497
      %533 = vmatprep.subr.bf16.mxu0 0
      %534 = vmatpush1.bf16.msra.mxu0 %v496
      %535 = vmatprep.subr.bf16.mxu0 0
      %536 = vmatpush1.bf16.msra.mxu0 %v495
      %537 = vmatprep.subr.bf16.mxu0 0
      %538 = vmatpush1.bf16.msra.mxu0 %v494
      %539 = vmatprep.subr.bf16.mxu0 0
      %540 = vmatpush1.bf16.msra.mxu0 %v493
      %541 = vmatprep.subr.bf16.mxu0 0
      %542 = vmatpush2.bf16.msra.mxu0 %v508
      %543 = vmatprep.subr.bf16.mxu0 0
      %544 = vmatpush2.bf16.msra.mxu0 %v507
      %545 = vmatprep.subr.bf16.mxu0 0
      %546 = vmatpush2.bf16.msra.mxu0 %v506
      %547 = vmatprep.subr.bf16.mxu0 0
      %548 = vmatpush2.bf16.msra.mxu0 %v505
      %549 = vmatprep.subr.bf16.mxu0 0
      %550 = vmatpush2.bf16.msra.mxu0 %v504
      %551 = vmatprep.subr.bf16.mxu0 0
      %552 = vmatpush2.bf16.msra.mxu0 %v503
      %553 = vmatprep.subr.bf16.mxu0 0
      %554 = vmatpush2.bf16.msra.mxu0 %v502
      %555 = vmatprep.subr.bf16.mxu0 0
      %556 = vmatpush2.bf16.msra.mxu0 %v501
      %557 = vmatprep.mubr.bf16.mxu0 %v398
      %558 = vmatmul.mubr.bf16.gmra.mxu0 %v397
      %v559 = vpop.f32.mrf.mxu0
      %v560 = vadd.f32 0.0, %v559
      %v561 = vpop.f32.mrf.mxu0
      %v562 = vpop.f32.mrf.mxu0
      %v563 = vadd.f32 0.0, %v562
      %v564 = vpop.f32.mrf.mxu0
      %565 = vmatprep.mubr.bf16.mxu0 %v400
      %566 = vmatmul.mubr.bf16.gmra.mxu0 %v399
      %v567 = vpop.f32.mrf.mxu0
      %v568 = vadd.f32 0.0, %v567
      %v569 = vpop.f32.mrf.mxu0
      %v570 = vpop.f32.mrf.mxu0
      %v571 = vadd.f32 0.0, %v570
      %v572 = vpop.f32.mrf.mxu0
      %573 = vmatprep.mubr.bf16.mxu0 %v402
      %574 = vmatmul.mubr.bf16.gmra.mxu0 %v401
      %v575 = vpop.f32.mrf.mxu0
      %v576 = vadd.f32 0.0, %v575
      %v577 = vpop.f32.mrf.mxu0
      %v578 = vpop.f32.mrf.mxu0
      %v579 = vadd.f32 0.0, %v578
      %v580 = vpop.f32.mrf.mxu0
      %581 = vmatprep.mubr.bf16.mxu0 %v404
      %582 = vmatmul.mubr.bf16.gmra.mxu0 %v403
      %v583 = vpop.f32.mrf.mxu0
      %v584 = vadd.f32 0.0, %v583
      %v585 = vpop.f32.mrf.mxu0
      %v586 = vpop.f32.mrf.mxu0
      %v587 = vadd.f32 0.0, %v586
      %v588 = vpop.f32.mrf.mxu0
      %589 = vmatprep.mubr.bf16.mxu0 %v406
      %590 = vmatmul.mubr.bf16.gmra.mxu0 %v405
      %v591 = vpop.f32.mrf.mxu0
      %v592 = vadd.f32 0.0, %v591
      %v593 = vpop.f32.mrf.mxu0
      %v594 = vpop.f32.mrf.mxu0
      %v595 = vadd.f32 0.0, %v594
      %v596 = vpop.f32.mrf.mxu0
      %597 = vmatprep.mubr.bf16.mxu0 %v408
      %598 = vmatmul.mubr.bf16.gmra.mxu0 %v407
      %v599 = vpop.f32.mrf.mxu0
      %v600 = vadd.f32 0.0, %v599
      %v601 = vpop.f32.mrf.mxu0
      %v602 = vpop.f32.mrf.mxu0
      %v603 = vadd.f32 0.0, %v602
      %v604 = vpop.f32.mrf.mxu0
      %605 = vmatprep.mubr.bf16.mxu0 %v410
      %606 = vmatmul.mubr.bf16.gmra.mxu0 %v409
      %v607 = vpop.f32.mrf.mxu0
      %v608 = vadd.f32 0.0, %v607
      %v609 = vpop.f32.mrf.mxu0
      %v610 = vpop.f32.mrf.mxu0
      %v611 = vadd.f32 0.0, %v610
      %v612 = vpop.f32.mrf.mxu0
      %613 = vmatprep.mubr.bf16.mxu0 %v412
      %614 = vmatmul.mubr.bf16.gmra.mxu0 %v411
      %v615 = vpop.f32.mrf.mxu0
      %v616 = vadd.f32 0.0, %v615
      %v617 = vpop.f32.mrf.mxu0
      %v618 = vpop.f32.mrf.mxu0
      %v619 = vadd.f32 0.0, %v618
      %v620 = vpop.f32.mrf.mxu0
      %621 = vdwg.mxu0
      %v622 = vadd.f32 %v317, %v560
      %v623 = vadd.f32 %v318, %v563
      %v624 = vadd.f32 %v319, %v568
      %v625 = vadd.f32 %v320, %v571
      %v626 = vadd.f32 %v321, %v576
      %v627 = vadd.f32 %v322, %v579
      %v628 = vadd.f32 %v323, %v584
      %v629 = vadd.f32 %v324, %v587
      %v630 = vadd.f32 %v325, %v592
      %v631 = vadd.f32 %v326, %v595
      %v632 = vadd.f32 %v327, %v600
      %v633 = vadd.f32 %v328, %v603
      %v634 = vadd.f32 %v329, %v608
      %v635 = vadd.f32 %v330, %v611
      %v636 = vadd.f32 %v331, %v616
      %v637 = vadd.f32 %v332, %v619
      %638 = vst [vmem:[#allocation2] sm:$0xff] %v622
      %639 = vst [vmem:[#allocation2 + $0x8] sm:$0xff] %v623
      %640 = vst [vmem:[#allocation2 + $0x10] sm:$0xff] %v624
      %641 = vst [vmem:[#allocation2 + $0x18] sm:$0xff] %v625
      %642 = vst [vmem:[#allocation2 + $0x20] sm:$0xff] %v626
      %643 = vst [vmem:[#allocation2 + $0x28] sm:$0xff] %v627
      %644 = vst [vmem:[#allocation2 + $0x30] sm:$0xff] %v628
      %645 = vst [vmem:[#allocation2 + $0x38] sm:$0xff] %v629
      %646 = vst [vmem:[#allocation2 + $0x40] sm:$0xff] %v630
      %647 = vst [vmem:[#allocation2 + $0x48] sm:$0xff] %v631
      %648 = vst [vmem:[#allocation2 + $0x50] sm:$0xff] %v632
      %649 = vst [vmem:[#allocation2 + $0x58] sm:$0xff] %v633
      %650 = vst [vmem:[#allocation2 + $0x60] sm:$0xff] %v634
      %651 = vst [vmem:[#allocation2 + $0x68] sm:$0xff] %v635
      %652 = vst [vmem:[#allocation2 + $0x70] sm:$0xff] %v636
      %653 = vst [vmem:[#allocation2 + $0x78] sm:$0xff] %v637
      // Predicated region
      $region45: #{_forward.3} parent=39 // pred_check
        %p654 = pneg %p260
      $region46: #{_forward.3} parent=39 // pred_check_branch
        %656 = sbr.rel (%p654) target = $region48
      $region47: #{_forward.3} parent=39 // pred_region
        %v657 = vld [vmem:[#allocation2] sm:$0xff]
        %v658 = vld [vmem:[#allocation2 + $0x8] sm:$0xff]
        %v659 = vld [vmem:[#allocation2 + $0x10] sm:$0xff]
        %v660 = vld [vmem:[#allocation2 + $0x18] sm:$0xff]
        %v661 = vld [vmem:[#allocation2 + $0x20] sm:$0xff]
        %v662 = vld [vmem:[#allocation2 + $0x28] sm:$0xff]
        %v663 = vld [vmem:[#allocation2 + $0x30] sm:$0xff]
        %v664 = vld [vmem:[#allocation2 + $0x38] sm:$0xff]
        %v665 = vld [vmem:[#allocation2 + $0x40] sm:$0xff]
        %v666 = vld [vmem:[#allocation2 + $0x48] sm:$0xff]
        %v667 = vld [vmem:[#allocation2 + $0x50] sm:$0xff]
        %v668 = vld [vmem:[#allocation2 + $0x58] sm:$0xff]
        %v669 = vld [vmem:[#allocation2 + $0x60] sm:$0xff]
        %v670 = vld [vmem:[#allocation2 + $0x68] sm:$0xff]
        %v671 = vld [vmem:[#allocation2 + $0x70] sm:$0xff]
        %v672 = vld [vmem:[#allocation2 + $0x78] sm:$0xff]
        %v673 = vld [vmem:[%s2] sm:$0x1]
        %v675 = vlaneseq
        %v676 = vshrl.u32 %v675, 7
        %v677 = vsub.s32 0, %v676
        %v678 = vrot.slane %v673, %v677
        %v680 = vadd.f32 %v657, %v678
        %v681 = vadd.f32 %v658, %v678
        %v682 = vadd.f32 %v659, %v678
        %v683 = vadd.f32 %v660, %v678
        %v684 = vadd.f32 %v661, %v678
        %v685 = vadd.f32 %v662, %v678
        %v686 = vadd.f32 %v663, %v678
        %v687 = vadd.f32 %v664, %v678
        %v688 = vadd.f32 %v665, %v678
        %v689 = vadd.f32 %v666, %v678
        %v690 = vadd.f32 %v667, %v678
        %v691 = vadd.f32 %v668, %v678
        %v692 = vadd.f32 %v669, %v678
        %v693 = vadd.f32 %v670, %v678
        %v694 = vadd.f32 %v671, %v678
        %v695 = vadd.f32 %v672, %v678
        %v696 = vmax.f32 %v680, 0.0
        %v697 = vmax.f32 %v681, 0.0
        %v698 = vmax.f32 %v682, 0.0
        %v699 = vmax.f32 %v683, 0.0
        %v700 = vmax.f32 %v684, 0.0
        %v701 = vmax.f32 %v685, 0.0
        %v702 = vmax.f32 %v686, 0.0
        %v703 = vmax.f32 %v687, 0.0
        %v704 = vmax.f32 %v688, 0.0
        %v705 = vmax.f32 %v689, 0.0
        %v706 = vmax.f32 %v690, 0.0
        %v707 = vmax.f32 %v691, 0.0
        %v708 = vmax.f32 %v692, 0.0
        %v709 = vmax.f32 %v693, 0.0
        %v710 = vmax.f32 %v694, 0.0
        %v711 = vmax.f32 %v695, 0.0
        %v712 = vpack.c.bf16 %v697, %v696
        %v713 = vpack.c.bf16 %v699, %v698
        %v714 = vpack.c.bf16 %v701, %v700
        %v715 = vpack.c.bf16 %v703, %v702
        %v716 = vpack.c.bf16 %v705, %v704
        %v717 = vpack.c.bf16 %v707, %v706
        %v718 = vpack.c.bf16 %v709, %v708
        %v719 = vpack.c.bf16 %v711, %v710
        %v720 = vld [vmem:[%s3] sm:$0xf]
        %v721 = vld [vmem:[%s3 + $0x4] sm:$0xf]
        %v722 = vld [vmem:[%s3 + $0x8] sm:$0xf]
        %v723 = vld [vmem:[%s3 + $0xc] sm:$0xf]
        %v724 = vld [vmem:[%s3 + $0x10] sm:$0xf]
        %v725 = vld [vmem:[%s3 + $0x14] sm:$0xf]
        %v726 = vld [vmem:[%s3 + $0x18] sm:$0xf]
        %v727 = vld [vmem:[%s3 + $0x1c] sm:$0xf]
        %v728 = vld [vmem:[%s3 + $0x20] sm:$0xf]
        %v729 = vld [vmem:[%s3 + $0x24] sm:$0xf]
        %v730 = vld [vmem:[%s3 + $0x28] sm:$0xf]
        %v731 = vld [vmem:[%s3 + $0x2c] sm:$0xf]
        %v732 = vld [vmem:[%s3 + $0x30] sm:$0xf]
        %v733 = vld [vmem:[%s3 + $0x34] sm:$0xf]
        %v734 = vld [vmem:[%s3 + $0x38] sm:$0xf]
        %v735 = vld [vmem:[%s3 + $0x3c] sm:$0xf]
        %v736 = vld [vmem:[%s4] sm:$0x1]
        %v738 = vlaneseq
        %v739 = vshrl.u32 %v738, 7
        %v740 = vsub.s32 0, %v739
        %v741 = vrot.slane %v736, %v740
        %v759 = vunpack.c.l.b16 %v720
        %v760 = vunpack.c.l.b16 %v721
        %v761 = vunpack.c.l.b16 %v722
        %v762 = vunpack.c.l.b16 %v723
        %v763 = vunpack.c.l.b16 %v724
        %v764 = vunpack.c.l.b16 %v725
        %v765 = vunpack.c.l.b16 %v726
        %v766 = vunpack.c.l.b16 %v727
        %v767 = vunpack.c.l.b16 %v728
        %v768 = vunpack.c.l.b16 %v729
        %v769 = vunpack.c.l.b16 %v730
        %v770 = vunpack.c.l.b16 %v731
        %v771 = vunpack.c.l.b16 %v732
        %v772 = vunpack.c.l.b16 %v733
        %v773 = vunpack.c.l.b16 %v734
        %v774 = vunpack.c.l.b16 %v735
        %v775 = vpack.c.b16 %v760, %v759
        %v776 = vpack.c.b16 %v762, %v761
        %v777 = vpack.c.b16 %v764, %v763
        %v778 = vpack.c.b16 %v766, %v765
        %v779 = vpack.c.b16 %v768, %v767
        %v780 = vpack.c.b16 %v770, %v769
        %v781 = vpack.c.b16 %v772, %v771
        %v782 = vpack.c.b16 %v774, %v773
        %791 = vmatprep.subr.bf16.mxu0 0
        %792 = vmatpush1.bf16.msra.mxu0 %v782
        %793 = vmatprep.subr.bf16.mxu0 0
        %794 = vmatpush1.bf16.msra.mxu0 %v781
        %795 = vmatprep.subr.bf16.mxu0 0
        %796 = vmatpush1.bf16.msra.mxu0 %v780
        %797 = vmatprep.subr.bf16.mxu0 0
        %798 = vmatpush1.bf16.msra.mxu0 %v779
        %799 = vmatprep.subr.bf16.mxu0 0
        %800 = vmatpush1.bf16.msra.mxu0 %v778
        %801 = vmatprep.subr.bf16.mxu0 0
        %802 = vmatpush1.bf16.msra.mxu0 %v777
        %803 = vmatprep.subr.bf16.mxu0 0
        %804 = vmatpush1.bf16.msra.mxu0 %v776
        %805 = vmatprep.subr.bf16.mxu0 0
        %806 = vmatpush1.bf16.msra.mxu0 %v775
        %807 = vmatprep.subr.bf16.mxu0 0
        %808 = vmatpush2.bf16.msra.mxu0 0
        %809 = vmatprep.subr.bf16.mxu0 0
        %810 = vmatpush2.bf16.msra.mxu0 0
        %811 = vmatprep.subr.bf16.mxu0 0
        %812 = vmatpush2.bf16.msra.mxu0 0
        %813 = vmatprep.subr.bf16.mxu0 0
        %814 = vmatpush2.bf16.msra.mxu0 0
        %815 = vmatprep.subr.bf16.mxu0 0
        %816 = vmatpush2.bf16.msra.mxu0 0
        %817 = vmatprep.subr.bf16.mxu0 0
        %818 = vmatpush2.bf16.msra.mxu0 0
        %819 = vmatprep.subr.bf16.mxu0 0
        %820 = vmatpush2.bf16.msra.mxu0 0
        %821 = vmatprep.subr.bf16.mxu0 0
        %822 = vmatpush2.bf16.msra.mxu0 0
        %823 = vmatprep.mubr.bf16.mxu0 0
        %824 = vmatmul.mubr.bf16.gmra.mxu0 %v712
        %v825 = vpop.f32.mrf.mxu0
        %v826 = vadd.f32 %v741, %v825
        %v827 = vpop.f32.mrf.mxu0
        %v828 = vpop.f32.mrf.mxu0
        %v829 = vadd.f32 %v741, %v828
        %v830 = vpop.f32.mrf.mxu0
        %831 = vmatprep.mubr.bf16.mxu0 0
        %832 = vmatmul.mubr.bf16.gmra.mxu0 %v713
        %v833 = vpop.f32.mrf.mxu0
        %v834 = vadd.f32 %v741, %v833
        %v835 = vpop.f32.mrf.mxu0
        %v836 = vpop.f32.mrf.mxu0
        %v837 = vadd.f32 %v741, %v836
        %v838 = vpop.f32.mrf.mxu0
        %839 = vmatprep.mubr.bf16.mxu0 0
        %840 = vmatmul.mubr.bf16.gmra.mxu0 %v714
        %v841 = vpop.f32.mrf.mxu0
        %v842 = vadd.f32 %v741, %v841
        %v843 = vpop.f32.mrf.mxu0
        %v844 = vpop.f32.mrf.mxu0
        %v845 = vadd.f32 %v741, %v844
        %v846 = vpop.f32.mrf.mxu0
        %847 = vmatprep.mubr.bf16.mxu0 0
        %848 = vmatmul.mubr.bf16.gmra.mxu0 %v715
        %v849 = vpop.f32.mrf.mxu0
        %v850 = vadd.f32 %v741, %v849
        %v851 = vpop.f32.mrf.mxu0
        %v852 = vpop.f32.mrf.mxu0
        %v853 = vadd.f32 %v741, %v852
        %v854 = vpop.f32.mrf.mxu0
        %855 = vmatprep.mubr.bf16.mxu0 0
        %856 = vmatmul.mubr.bf16.gmra.mxu0 %v716
        %v857 = vpop.f32.mrf.mxu0
        %v858 = vadd.f32 %v741, %v857
        %v859 = vpop.f32.mrf.mxu0
        %v860 = vpop.f32.mrf.mxu0
        %v861 = vadd.f32 %v741, %v860
        %v862 = vpop.f32.mrf.mxu0
        %863 = vmatprep.mubr.bf16.mxu0 0
        %864 = vmatmul.mubr.bf16.gmra.mxu0 %v717
        %v865 = vpop.f32.mrf.mxu0
        %v866 = vadd.f32 %v741, %v865
        %v867 = vpop.f32.mrf.mxu0
        %v868 = vpop.f32.mrf.mxu0
        %v869 = vadd.f32 %v741, %v868
        %v870 = vpop.f32.mrf.mxu0
        %871 = vmatprep.mubr.bf16.mxu0 0
        %872 = vmatmul.mubr.bf16.gmra.mxu0 %v718
        %v873 = vpop.f32.mrf.mxu0
        %v874 = vadd.f32 %v741, %v873
        %v875 = vpop.f32.mrf.mxu0
        %v876 = vpop.f32.mrf.mxu0
        %v877 = vadd.f32 %v741, %v876
        %v878 = vpop.f32.mrf.mxu0
        %879 = vmatprep.mubr.bf16.mxu0 0
        %880 = vmatmul.mubr.bf16.gmra.mxu0 %v719
        %v881 = vpop.f32.mrf.mxu0
        %v882 = vadd.f32 %v741, %v881
        %v883 = vpop.f32.mrf.mxu0
        %v884 = vpop.f32.mrf.mxu0
        %v885 = vadd.f32 %v741, %v884
        %v886 = vpop.f32.mrf.mxu0
        %887 = vdwg.mxu0
        %v888 = vxor.u32 %v826, 2147483648
        %v889 = vxor.u32 %v829, 2147483648
        %v890 = vxor.u32 %v834, 2147483648
        %v891 = vxor.u32 %v837, 2147483648
        %v892 = vxor.u32 %v842, 2147483648
        %v893 = vxor.u32 %v845, 2147483648
        %v894 = vxor.u32 %v850, 2147483648
        %v895 = vxor.u32 %v853, 2147483648
        %v896 = vxor.u32 %v858, 2147483648
        %v897 = vxor.u32 %v861, 2147483648
        %v898 = vxor.u32 %v866, 2147483648
        %v899 = vxor.u32 %v869, 2147483648
        %v900 = vxor.u32 %v874, 2147483648
        %v901 = vxor.u32 %v877, 2147483648
        %v902 = vxor.u32 %v882, 2147483648
        %v903 = vxor.u32 %v885, 2147483648
        %v904 = vmul.f32 %v888, 1.442695
        %v905 = vpow.pop %v904
        %v906 = vmul.f32 %v889, 1.442695
        %v907 = vpow.pop %v906
        %v908 = vmul.f32 %v890, 1.442695
        %v909 = vpow.pop %v908
        %v910 = vmul.f32 %v891, 1.442695
        %v911 = vpow.pop %v910
        %v912 = vmul.f32 %v892, 1.442695
        %v913 = vpow.pop %v912
        %v914 = vmul.f32 %v893, 1.442695
        %v915 = vpow.pop %v914
        %v916 = vmul.f32 %v894, 1.442695
        %v917 = vpow.pop %v916
        %v918 = vmul.f32 %v895, 1.442695
        %v919 = vpow.pop %v918
        %v920 = vmul.f32 %v896, 1.442695
        %v921 = vpow.pop %v920
        %v922 = vmul.f32 %v897, 1.442695
        %v923 = vpow.pop %v922
        %v924 = vmul.f32 %v898, 1.442695
        %v925 = vpow.pop %v924
        %v926 = vmul.f32 %v899, 1.442695
        %v927 = vpow.pop %v926
        %v928 = vmul.f32 %v900, 1.442695
        %v929 = vpow.pop %v928
        %v930 = vmul.f32 %v901, 1.442695
        %v931 = vpow.pop %v930
        %v932 = vmul.f32 %v902, 1.442695
        %v933 = vpow.pop %v932
        %v934 = vmul.f32 %v903, 1.442695
        %v935 = vpow.pop %v934
        %v936 = vadd.f32 %v905, 1.0
        %v937 = vadd.f32 %v907, 1.0
        %v938 = vadd.f32 %v909, 1.0
        %v939 = vadd.f32 %v911, 1.0
        %v940 = vadd.f32 %v913, 1.0
        %v941 = vadd.f32 %v915, 1.0
        %v942 = vadd.f32 %v917, 1.0
        %v943 = vadd.f32 %v919, 1.0
        %v944 = vadd.f32 %v921, 1.0
        %v945 = vadd.f32 %v923, 1.0
        %v946 = vadd.f32 %v925, 1.0
        %v947 = vadd.f32 %v927, 1.0
        %v948 = vadd.f32 %v929, 1.0
        %v949 = vadd.f32 %v931, 1.0
        %v950 = vadd.f32 %v933, 1.0
        %v951 = vadd.f32 %v935, 1.0
        %v952 = vrcp.pop %v936
        %v953 = vmul.f32 1.0, %v952
        %v954 = vrcp.pop %v937
        %v955 = vmul.f32 1.0, %v954
        %v956 = vrcp.pop %v938
        %v957 = vmul.f32 1.0, %v956
        %v958 = vrcp.pop %v939
        %v959 = vmul.f32 1.0, %v958
        %v960 = vrcp.pop %v940
        %v961 = vmul.f32 1.0, %v960
        %v962 = vrcp.pop %v941
        %v963 = vmul.f32 1.0, %v962
        %v964 = vrcp.pop %v942
        %v965 = vmul.f32 1.0, %v964
        %v966 = vrcp.pop %v943
        %v967 = vmul.f32 1.0, %v966
        %v968 = vrcp.pop %v944
        %v969 = vmul.f32 1.0, %v968
        %v970 = vrcp.pop %v945
        %v971 = vmul.f32 1.0, %v970
        %v972 = vrcp.pop %v946
        %v973 = vmul.f32 1.0, %v972
        %v974 = vrcp.pop %v947
        %v975 = vmul.f32 1.0, %v974
        %v976 = vrcp.pop %v948
        %v977 = vmul.f32 1.0, %v976
        %v978 = vrcp.pop %v949
        %v979 = vmul.f32 1.0, %v978
        %v980 = vrcp.pop %v950
        %v981 = vmul.f32 1.0, %v980
        %v982 = vrcp.pop %v951
        %v983 = vmul.f32 1.0, %v982
        %984 = vst [vmem:[%s257] sm:$0xff] %v953
        %985 = vst [vmem:[%s257 + $0x8] sm:$0xff] %v955
        %986 = vst [vmem:[%s257 + $0x10] sm:$0xff] %v957
        %987 = vst [vmem:[%s257 + $0x18] sm:$0xff] %v959
        %988 = vst [vmem:[%s257 + $0x20] sm:$0xff] %v961
        %989 = vst [vmem:[%s257 + $0x28] sm:$0xff] %v963
        %990 = vst [vmem:[%s257 + $0x30] sm:$0xff] %v965
        %991 = vst [vmem:[%s257 + $0x38] sm:$0xff] %v967
        %992 = vst [vmem:[%s257 + $0x40] sm:$0xff] %v969
        %993 = vst [vmem:[%s257 + $0x48] sm:$0xff] %v971
        %994 = vst [vmem:[%s257 + $0x50] sm:$0xff] %v973
        %995 = vst [vmem:[%s257 + $0x58] sm:$0xff] %v975
        %996 = vst [vmem:[%s257 + $0x60] sm:$0xff] %v977
        %997 = vst [vmem:[%s257 + $0x68] sm:$0xff] %v979
        %998 = vst [vmem:[%s257 + $0x70] sm:$0xff] %v981
        %999 = vst [vmem:[%s257 + $0x78] sm:$0xff] %v983
      $region48: #{_forward.3} parent=39 // pred_fallthru
        _
      %s1000 = smul.u32 16, %s20
      %p1001 = scmp.lt.s32.totalorder %s1000, 31
      %s1002 = scalar_select %p1001, %s1000, 31
      %s1003 = smul.addr %s1002, 8
      %s1004 = scalar_lea.vmem %s5, %s1003
      // Predicated region
      $region49: #{_forward.3} parent=39 // pred_check
        %p1005 = pneg %p158
      $region50: #{_forward.3} parent=39 // pred_check_branch
        %1007 = sbr.rel (%p1005) target = $region52
      $region51: #{_forward.3} parent=39 // pred_region
        %s1008 = smul.u32 16, %s20
      $region52: #{_forward.3} parent=39 // pred_fallthru
        _
    $region40: #{_forward.3} parent=5 // pred_fallthru
      _
    %p1009 = scmp.le.s32.totalorder 2, %s11
    // Predicated region
    $region53: #{_forward.3} parent=5 // pred_check
      %p1010 = pneg %p1009
    $region54: #{_forward.3} parent=5 // pred_check_branch
      %1012 = sbr.rel (%p1010) target = $region56
    $region55: #{_forward.3} parent=5 // pred_region
      %s1013 = ssub.s32 %s11, 2
      // Predicated region
      $region57: #{_forward.3} parent=55 // pred_check
        %p1014 = pneg %p164
      $region58: #{_forward.3} parent=55 // pred_check_branch
        %1016 = sbr.rel (%p1014) target = $region60
      $region59: #{_forward.3} parent=55 // pred_region
        %s1017 = smul.u32 16, %s22
        %p1018 = scmp.lt.s32.totalorder %s1017, 31
        %s1019 = scalar_select %p1018, %s1017, 31
        %s1020 = smul.addr %s1019, 8
        %s1021 = scalar_lea.vmem %s5, %s1020
      $region60: #{_forward.3} parent=55 // pred_fallthru
        _
    $region56: #{_forward.3} parent=5 // pred_fallthru
      _
  $region6: #{_forward.3} parent=0 // loop_footer
    %s15 = sadd.s32 1, %s11
  $region7: #{_forward.3} parent=0 // loop_footer_branch
    %10 = sbr.rel target = $region3
  $region8: #{_forward.3} parent=0 // loop_exit
    _

</llo_original>
